<compile_context>
chip_gen: v6e
topology: v6e:2x2x1
jax: 0.10.0
libtpu: 0.0.40
codegen_flags: <defaults>
</compile_context>

<pallas_src>
import functools
from math import sqrt

import jax
import jax.numpy as jnp
from jax.experimental import pallas as pl
from jax.experimental.pallas import tpu as pltpu

EPS = 1e-12  # F.normalize default eps


def _feature_encoder_kernel(
    x_ref,        # (b*n, f)  f32 activations
    vec_ref,      # (6, vw)   f32 packed rows:
                  #   0: g_attn*sqrt(f)  1: bo  2: g1*sqrt(f)
                  #   3: b1 (width ffh)  4: b2  5: g2*sqrt(f)
    wqkv_ref,     # (3, H, f, D) bf16; 1/sqrt(D) folded into the q slice
    wo_ref,       # (H, D, f)    bf16
    w1_ref,       # (f, ffh)     bf16
    w2_ref,       # (ffh, f)     bf16
    o_ref,        # (b*n, f)
    *, batch, heads, dim_head, ffh, compute_dtype,
):
    bn, f = x_ref.shape
    n = bn // batch
    cdt = compute_dtype

    x = x_ref[...].astype(jnp.float32)                        # (b*n, f) f32

    vec = vec_ref[...]                                        # (6, vw) f32
    g_attn = vec[0:1, :f]
    bo     = vec[1:2, :f]
    g1     = vec[2:3, :f]
    b1     = vec[3:4, :ffh]
    b2     = vec[4:5, :f]
    g2     = vec[5:6, :f]

    def rms(t, g_scaled):
        # Matches F.normalize(x, dim=channel) * g * sqrt(f)  (sqrt(f) folded
        # into g on the host):  x / max(||x||, eps) == x * rsqrt(max(||x||^2,
        # eps^2))  -> EUP rsqrt.
        ss = jnp.sum(t * t, axis=-1, keepdims=True)
        return t * jax.lax.rsqrt(jnp.maximum(ss, EPS * EPS)) * g_scaled

    # ---- SelfAttention(x) + x ---------------------------------------------
    xn = rms(x, g_attn)
    xn_c = xn.astype(cdt)                                     # cast once (MXU operand)

    att = jnp.zeros((bn, f), jnp.float32)
    for h in range(heads):  # static unroll; leading-axis weight indexing only —
        #                     no lane-axis activation slicing, no concatenate.
        qh = jnp.dot(xn_c, wqkv_ref[0, h], preferred_element_type=jnp.float32)  # (b*n, D)
        kh = jnp.dot(xn_c, wqkv_ref[1, h], preferred_element_type=jnp.float32)
        vh = jnp.dot(xn_c, wqkv_ref[2, h], preferred_element_type=jnp.float32)
        qh3 = qh.astype(cdt).reshape(batch, n, dim_head)      # leading-dim split only
        kh3 = kh.astype(cdt).reshape(batch, n, dim_head)
        vh3 = vh.astype(cdt).reshape(batch, n, dim_head)
        sim = jnp.einsum("bnd,bmd->bnm", qh3, kh3,
                         preferred_element_type=jnp.float32)  # (b, n, n) f32
        sim = sim - jnp.max(sim, axis=-1, keepdims=True)
        p = jnp.exp(sim)
        p = p * pl.reciprocal(jnp.sum(p, axis=-1, keepdims=True), approx=True)
        oh = jnp.einsum("bnm,bmd->bnd", p.astype(cdt), vh3,
                        preferred_element_type=jnp.float32)   # (b, n, D)
        att = att + jnp.dot(oh.astype(cdt).reshape(bn, dim_head), wo_ref[h],
                            preferred_element_type=jnp.float32)
    x = (att + bo) + x

    # ---- layer_norm_1 -------------------------------------------------------
    x = rms(x, g1)

    # ---- feed_forward(x) + x -----------------------------------------------
    h1 = jnp.dot(x.astype(cdt), w1_ref[...],
                 preferred_element_type=jnp.float32) + b1
    h1 = h1 * jax.nn.sigmoid(h1)                              # nn.SiLU, f32
    ff = jnp.dot(h1.astype(cdt), w2_ref[...],
                 preferred_element_type=jnp.float32) + b2
    x = ff + x

    # ---- layer_norm_2 -------------------------------------------------------
    x = rms(x, g2)

    o_ref[...] = x.astype(o_ref.dtype)


def feature_encoder_block(features, params, *, heads, dim_head,
                          compute_dtype=jnp.bfloat16):
    """features: (b, n, f) float32; params: dict of weights (see __main__)."""
    b, n, f = features.shape
    ffh = params["w1"].shape[1]
    scale = jnp.float32(dim_head) ** -0.5
    sqrt_f = jnp.sqrt(jnp.float32(f))
    cdt = compute_dtype
    f32 = jnp.float32

    # ---- Host-side weight prep ---------------------------------------------
    # Split heads onto a leading axis, fold the q scale into wq, stack q/k/v on
    # one leading axis (single DMA), and cast MXU operands to compute dtype.
    def split_heads_in(w):          # (f, H*D) -> (H, f, D)
        return jnp.transpose(w.reshape(f, heads, dim_head), (1, 0, 2))

    wqkv = jnp.stack([split_heads_in(params["wq"]) * scale,
                      split_heads_in(params["wk"]),
                      split_heads_in(params["wv"])], axis=0).astype(cdt)  # (3,H,f,D)
    wo_h = params["wo"].reshape(heads, dim_head, f).astype(cdt)           # (H,D,f)
    w1 = params["w1"].astype(cdt)                                         # (f,ffh)
    w2 = params["w2"].astype(cdt)                                         # (ffh,f)

    # Pack all gain/bias vectors into a single f32 array (one DMA); RMSNorm
    # gains pre-scaled by sqrt(f).
    vw = max(f, ffh)

    def row(v, w):
        v = v.reshape(1, -1).astype(f32)
        return jnp.pad(v, ((0, 0), (0, w - v.shape[1])))

    vecs = jnp.concatenate([
        row(params["g_attn"] * sqrt_f, vw),
        row(params["bo"], vw),
        row(params["g1"] * sqrt_f, vw),
        row(params["b1"], vw),
        row(params["b2"], vw),
        row(params["g2"] * sqrt_f, vw),
    ], axis=0)                                                            # (6, vw)

    x2d = features.reshape(b * n, f)   # free, contiguous

    inputs = [x2d, vecs, wqkv, wo_h, w1, w2]

    # Whole problem in one block: activations + weights are only a few KB,
    # trivially fit VMEM on every TPU generation, one grid step amortizes
    # overhead.
    def full(a):
        return pl.BlockSpec(a.shape, lambda i, nd=a.ndim: (0,) * nd)

    kernel = functools.partial(_feature_encoder_kernel, batch=b, heads=heads,
                               dim_head=dim_head, ffh=ffh, compute_dtype=cdt)

    out2d = pl.pallas_call(
        kernel,
        out_shape=jax.ShapeDtypeStruct((b * n, f), features.dtype),
        grid_spec=pltpu.PrefetchScalarGridSpec(
            num_scalar_prefetch=0,
            grid=(1,),
            in_specs=[full(a) for a in inputs],
            out_specs=pl.BlockSpec((b * n, f), lambda i: (0, 0)),
        ),
        compiler_params=pltpu.CompilerParams(
            dimension_semantics=("arbitrary",)),
    )(*inputs)

    return out2d.reshape(b, n, f)


def _reference(features, params, *, heads, dim_head, matmul_dtype=jnp.float32):
    """Plain-JAX mirror.  matmul_dtype=f32 reproduces the PyTorch module's math
    exactly; matmul_dtype=bf16 mirrors the kernel's MXU operand casts."""
    md = matmul_dtype
    f32 = jnp.float32

    def rms(x, g):
        ss = jnp.sum(x * x, axis=-1, keepdims=True)
        return x * jax.lax.rsqrt(jnp.maximum(ss, EPS * EPS)) * g * jnp.sqrt(f32(x.shape[-1]))

    def mm(a, w):
        return jnp.matmul(a.astype(md), w.astype(md), preferred_element_type=f32)

    x = features.astype(f32)
    b, n, f = x.shape
    scale = f32(dim_head) ** -0.5

    xn = rms(x, params["g_attn"])
    q = mm(xn, params["wq"] * scale)     # scale folded into weight, like kernel
    k = mm(xn, params["wk"])
    v = mm(xn, params["wv"])

    def split(t):
        return t.reshape(b, n, heads, dim_head).transpose(0, 2, 1, 3)

    qh, kh, vh = split(q), split(k), split(v)
    sim = jnp.einsum("bhnd,bhmd->bhnm", qh.astype(md), kh.astype(md),
                     preferred_element_type=f32)
    sim = sim - jnp.max(sim, axis=-1, keepdims=True)
    p = jnp.exp(sim)
    p = p / jnp.sum(p, axis=-1, keepdims=True)
    o = jnp.einsum("bhnm,bhmd->bhnd", p.astype(md), vh.astype(md),
                   preferred_element_type=f32)
    o = o.transpose(0, 2, 1, 3).reshape(b, n, heads * dim_head)
    x = (mm(o, params["wo"]) + params["bo"]) + x

    x = rms(x, params["g1"])
    h1 = mm(x, params["w1"]) + params["b1"]
    h1 = h1 * jax.nn.sigmoid(h1)
    x = (mm(h1, params["w2"]) + params["b2"]) + x
    return rms(x, params["g2"])


if __name__ == "__main__":
    # small shapes: batch=2, seq(n)=16, feature_dim(f)=32, heads=4, dim_head=8
    B, N, F = 2, 16, 32
    HEADS, DIM_HEAD = 4, 8
    HID = HEADS * DIM_HEAD                       # attention inner dim = 32
    FFH = int(sqrt(F * F) * 1.0)                 # hidden_dims=[1.0] -> 32

    key = jax.random.PRNGKey(0)
    keys = jax.random.split(key, 16)

    def nrm(k, shape, s=0.1):
        return jax.random.normal(k, shape, jnp.float32) * s

    params = {
        "g_attn": jnp.ones((1, F), jnp.float32),     # RMSNorm g init = ones
        "wq": nrm(keys[0], (F, HID)),
        "wk": nrm(keys[1], (F, HID)),
        "wv": nrm(keys[2], (F, HID)),
        "wo": nrm(keys[3], (HID, F)),
        "bo": nrm(keys[4], (1, F), 0.01),
        "g1": jnp.ones((1, F), jnp.float32),
        "w1": nrm(keys[5], (F, FFH)),
        "b1": nrm(keys[6], (1, FFH), 0.01),
        "w2": nrm(keys[7], (FFH, F)),
        "b2": nrm(keys[8], (1, F), 0.01),
        "g2": jnp.ones((1, F), jnp.float32),
    }

    features = jax.random.normal(keys[9], (B, N, F), jnp.float32)

    out = feature_encoder_block(features, params, heads=HEADS, dim_head=DIM_HEAD)
    out = jax.block_until_ready(out)
    assert out.shape == (B, N, F)

    # Strict check vs a plain-JAX mirror using the same bf16 MXU operand casts.
    ref_bf16 = _reference(features, params, heads=HEADS, dim_head=DIM_HEAD,
                          matmul_dtype=jnp.bfloat16)
    assert jnp.allclose(out, ref_bf16, atol=3e-3, rtol=3e-3), \
        "mismatch vs bf16-mirrored reference"

    # Loose check vs the exact f32 (PyTorch-semantics) reference.
    ref_f32 = _reference(features, params, heads=HEADS, dim_head=DIM_HEAD,
                         matmul_dtype=jnp.float32)
    assert jnp.allclose(out, ref_f32, atol=5e-2, rtol=5e-2), \
        "mismatch vs f32 reference"

    print("KERNEL_OK")
</pallas_src>

<mosaic_0001>
module attributes {stable_mosaic.version = 11 : i64} {
  func.func @_feature_encoder_kernel(%arg0: i32, %arg1: memref<32x32xf32, #tpu.memory_space<vmem>>, %arg2: memref<6x32xf32, #tpu.memory_space<vmem>>, %arg3: memref<3x4x32x8xbf16, #tpu.memory_space<vmem>>, %arg4: memref<4x8x32xbf16, #tpu.memory_space<vmem>>, %arg5: memref<32x32xbf16, #tpu.memory_space<vmem>>, %arg6: memref<32x32xbf16, #tpu.memory_space<vmem>>, %arg7: memref<32x32xf32, #tpu.memory_space<vmem>>) attributes {dimension_semantics = [#tpu.dimension_semantics<arbitrary>], iteration_bounds = array<i64: 1>, scalar_prefetch = 0 : i64, scratch_operands = 0 : i64, tpu.core_type = #tpu.core_type<tc>, window_params = [{pipeline_mode = #tpu.pipeline_mode<synchronous>, transform_indices = @transform_0, window_bounds = array<i64: 32, 32>}, {pipeline_mode = #tpu.pipeline_mode<synchronous>, transform_indices = @transform_1, window_bounds = array<i64: 6, 32>}, {pipeline_mode = #tpu.pipeline_mode<synchronous>, transform_indices = @transform_2, window_bounds = array<i64: 3, 4, 32, 8>}, {pipeline_mode = #tpu.pipeline_mode<synchronous>, transform_indices = @transform_3, window_bounds = array<i64: 4, 8, 32>}, {pipeline_mode = #tpu.pipeline_mode<synchronous>, transform_indices = @transform_4, window_bounds = array<i64: 32, 32>}, {pipeline_mode = #tpu.pipeline_mode<synchronous>, transform_indices = @transform_5, window_bounds = array<i64: 32, 32>}, {pipeline_mode = #tpu.pipeline_mode<synchronous>, transform_indices = @transform_6, window_bounds = array<i64: 32, 32>}]} {
    %c0 = arith.constant 0 : index
    %c0_0 = arith.constant 0 : index
    %0 = vector.load %arg1[%c0, %c0_0] : memref<32x32xf32, #tpu.memory_space<vmem>>, vector<32x32xf32>
    %c0_1 = arith.constant 0 : index
    %c0_2 = arith.constant 0 : index
    %1 = vector.load %arg2[%c0_1, %c0_2] : memref<6x32xf32, #tpu.memory_space<vmem>>, vector<6x32xf32>
    %2 = vector.extract_strided_slice %1 {offsets = [0, 0], sizes = [1, 32], strides = [1, 1]} : vector<6x32xf32> to vector<1x32xf32>
    %3 = vector.extract_strided_slice %1 {offsets = [1, 0], sizes = [1, 32], strides = [1, 1]} : vector<6x32xf32> to vector<1x32xf32>
    %4 = vector.extract_strided_slice %1 {offsets = [2, 0], sizes = [1, 32], strides = [1, 1]} : vector<6x32xf32> to vector<1x32xf32>
    %5 = vector.extract_strided_slice %1 {offsets = [3, 0], sizes = [1, 32], strides = [1, 1]} : vector<6x32xf32> to vector<1x32xf32>
    %6 = vector.extract_strided_slice %1 {offsets = [4, 0], sizes = [1, 32], strides = [1, 1]} : vector<6x32xf32> to vector<1x32xf32>
    %7 = vector.extract_strided_slice %1 {offsets = [5, 0], sizes = [1, 32], strides = [1, 1]} : vector<6x32xf32> to vector<1x32xf32>
    %8 = arith.mulf %0, %0 : vector<32x32xf32>
    %cst = arith.constant dense<0.000000e+00> : vector<32xf32>
    %9 = vector.multi_reduction <add>, %8, %cst [1] : vector<32x32xf32> to vector<32xf32>
    %10 = vector.shape_cast %9 : vector<32xf32> to vector<32x1xf32>
    %cst_3 = arith.constant 1.000000e-24 : f32
    %11 = vector.broadcast %cst_3 : f32 to vector<32x1xf32>
    %12 = arith.maximumf %10, %11 : vector<32x1xf32>
    %13 = math.rsqrt %12 : vector<32x1xf32>
    %14 = vector.broadcast %13 : vector<32x1xf32> to vector<32x32xf32>
    %15 = arith.mulf %0, %14 : vector<32x32xf32>
    %16 = vector.broadcast %2 : vector<1x32xf32> to vector<32x32xf32>
    %17 = arith.mulf %15, %16 : vector<32x32xf32>
    %18 = arith.truncf %17 : vector<32x32xf32> to vector<32x32xbf16>
    %cst_4 = arith.constant 0.000000e+00 : f32
    %19 = vector.broadcast %cst_4 : f32 to vector<32x32xf32>
    %c0_5 = arith.constant 0 : index
    %c0_6 = arith.constant 0 : index
    %c0_7 = arith.constant 0 : index
    %c0_8 = arith.constant 0 : index
    %20 = vector.load %arg3[%c0_5, %c0_6, %c0_7, %c0_8] : memref<3x4x32x8xbf16, #tpu.memory_space<vmem>>, vector<1x1x32x8xbf16>
    %21 = vector.shape_cast %20 : vector<1x1x32x8xbf16> to vector<32x8xbf16>
    %cst_9 = arith.constant dense<0.000000e+00> : vector<32x8xf32>
    %22 = tpu.matmul %18, %21, %cst_9 {dimension_numbers = #tpu.dot_dimension_numbers<[1], [0], [0], [1], [0, 0, 1, 1], [], []>} : vector<32x32xbf16>, vector<32x8xbf16>, vector<32x8xf32> -> vector<32x8xf32>
    %c1 = arith.constant 1 : index
    %c0_10 = arith.constant 0 : index
    %c0_11 = arith.constant 0 : index
    %c0_12 = arith.constant 0 : index
    %23 = vector.load %arg3[%c1, %c0_10, %c0_11, %c0_12] : memref<3x4x32x8xbf16, #tpu.memory_space<vmem>>, vector<1x1x32x8xbf16>
    %24 = vector.shape_cast %23 : vector<1x1x32x8xbf16> to vector<32x8xbf16>
    %cst_13 = arith.constant dense<0.000000e+00> : vector<32x8xf32>
    %25 = tpu.matmul %18, %24, %cst_13 {dimension_numbers = #tpu.dot_dimension_numbers<[1], [0], [0], [1], [0, 0, 1, 1], [], []>} : vector<32x32xbf16>, vector<32x8xbf16>, vector<32x8xf32> -> vector<32x8xf32>
    %c2 = arith.constant 2 : index
    %c0_14 = arith.constant 0 : index
    %c0_15 = arith.constant 0 : index
    %c0_16 = arith.constant 0 : index
    %26 = vector.load %arg3[%c2, %c0_14, %c0_15, %c0_16] : memref<3x4x32x8xbf16, #tpu.memory_space<vmem>>, vector<1x1x32x8xbf16>
    %27 = vector.shape_cast %26 : vector<1x1x32x8xbf16> to vector<32x8xbf16>
    %cst_17 = arith.constant dense<0.000000e+00> : vector<32x8xf32>
    %28 = tpu.matmul %18, %27, %cst_17 {dimension_numbers = #tpu.dot_dimension_numbers<[1], [0], [0], [1], [0, 0, 1, 1], [], []>} : vector<32x32xbf16>, vector<32x8xbf16>, vector<32x8xf32> -> vector<32x8xf32>
    %29 = arith.truncf %22 : vector<32x8xf32> to vector<32x8xbf16>
    %30 = vector.shape_cast %29 : vector<32x8xbf16> to vector<2x16x8xbf16>
    %31 = arith.truncf %25 : vector<32x8xf32> to vector<32x8xbf16>
    %32 = vector.shape_cast %31 : vector<32x8xbf16> to vector<2x16x8xbf16>
    %33 = arith.truncf %28 : vector<32x8xf32> to vector<32x8xbf16>
    %34 = vector.shape_cast %33 : vector<32x8xbf16> to vector<2x16x8xbf16>
    "tpu.trace_start"() <{level = 10 : i32, message = "bnd,bmd->bnm"}> : () -> ()
    %cst_18 = arith.constant dense<0.000000e+00> : vector<2x16x16xf32>
    %35 = tpu.matmul %30, %32, %cst_18 {dimension_numbers = #tpu.dot_dimension_numbers<[2], [2], [1], [1], [0, 0, 0, 1, 1, 1], [0], [0]>} : vector<2x16x8xbf16>, vector<2x16x8xbf16>, vector<2x16x16xf32> -> vector<2x16x16xf32>
    "tpu.trace_stop"() : () -> ()
    %cst_19 = arith.constant dense<0xFF800000> : vector<2x16xf32>
    %36 = vector.multi_reduction <maximumf>, %35, %cst_19 [2] : vector<2x16x16xf32> to vector<2x16xf32>
    %37 = vector.shape_cast %36 : vector<2x16xf32> to vector<2x16x1xf32>
    %38 = vector.broadcast %37 : vector<2x16x1xf32> to vector<2x16x16xf32>
    %39 = arith.subf %35, %38 : vector<2x16x16xf32>
    %40 = math.exp %39 : vector<2x16x16xf32>
    %cst_20 = arith.constant dense<0.000000e+00> : vector<2x16xf32>
    %41 = vector.multi_reduction <add>, %40, %cst_20 [2] : vector<2x16x16xf32> to vector<2x16xf32>
    %42 = vector.shape_cast %41 : vector<2x16xf32> to vector<2x16x1xf32>
    %43 = tpu.reciprocal %42 {approx = true} : vector<2x16x1xf32> -> vector<2x16x1xf32>
    %44 = vector.broadcast %43 : vector<2x16x1xf32> to vector<2x16x16xf32>
    %45 = arith.mulf %40, %44 : vector<2x16x16xf32>
    %46 = arith.truncf %45 : vector<2x16x16xf32> to vector<2x16x16xbf16>
    "tpu.trace_start"() <{level = 10 : i32, message = "bnm,bmd->bnd"}> : () -> ()
    %cst_21 = arith.constant dense<0.000000e+00> : vector<2x16x8xf32>
    %47 = tpu.matmul %46, %34, %cst_21 {dimension_numbers = #tpu.dot_dimension_numbers<[2], [1], [1], [2], [0, 0, 0, 1, 1, 2], [0], [0]>} : vector<2x16x16xbf16>, vector<2x16x8xbf16>, vector<2x16x8xf32> -> vector<2x16x8xf32>
    "tpu.trace_stop"() : () -> ()
    %48 = arith.truncf %47 : vector<2x16x8xf32> to vector<2x16x8xbf16>
    %49 = vector.shape_cast %48 : vector<2x16x8xbf16> to vector<32x8xbf16>
    %c0_22 = arith.constant 0 : index
    %c0_23 = arith.constant 0 : index
    %c0_24 = arith.constant 0 : index
    %50 = vector.load %arg4[%c0_22, %c0_23, %c0_24] : memref<4x8x32xbf16, #tpu.memory_space<vmem>>, vector<1x8x32xbf16>
    %51 = vector.shape_cast %50 : vector<1x8x32xbf16> to vector<8x32xbf16>
    %cst_25 = arith.constant dense<0.000000e+00> : vector<32x32xf32>
    %52 = tpu.matmul %49, %51, %cst_25 {dimension_numbers = #tpu.dot_dimension_numbers<[1], [0], [0], [1], [0, 0, 1, 1], [], []>} : vector<32x8xbf16>, vector<8x32xbf16>, vector<32x32xf32> -> vector<32x32xf32>
    %53 = arith.addf %19, %52 : vector<32x32xf32>
    %c0_26 = arith.constant 0 : index
    %c1_27 = arith.constant 1 : index
    %c0_28 = arith.constant 0 : index
    %c0_29 = arith.constant 0 : index
    %54 = vector.load %arg3[%c0_26, %c1_27, %c0_28, %c0_29] : memref<3x4x32x8xbf16, #tpu.memory_space<vmem>>, vector<1x1x32x8xbf16>
    %55 = vector.shape_cast %54 : vector<1x1x32x8xbf16> to vector<32x8xbf16>
    %cst_30 = arith.constant dense<0.000000e+00> : vector<32x8xf32>
    %56 = tpu.matmul %18, %55, %cst_30 {dimension_numbers = #tpu.dot_dimension_numbers<[1], [0], [0], [1], [0, 0, 1, 1], [], []>} : vector<32x32xbf16>, vector<32x8xbf16>, vector<32x8xf32> -> vector<32x8xf32>
    %c1_31 = arith.constant 1 : index
    %c1_32 = arith.constant 1 : index
    %c0_33 = arith.constant 0 : index
    %c0_34 = arith.constant 0 : index
    %57 = vector.load %arg3[%c1_31, %c1_32, %c0_33, %c0_34] : memref<3x4x32x8xbf16, #tpu.memory_space<vmem>>, vector<1x1x32x8xbf16>
    %58 = vector.shape_cast %57 : vector<1x1x32x8xbf16> to vector<32x8xbf16>
    %cst_35 = arith.constant dense<0.000000e+00> : vector<32x8xf32>
    %59 = tpu.matmul %18, %58, %cst_35 {dimension_numbers = #tpu.dot_dimension_numbers<[1], [0], [0], [1], [0, 0, 1, 1], [], []>} : vector<32x32xbf16>, vector<32x8xbf16>, vector<32x8xf32> -> vector<32x8xf32>
    %c2_36 = arith.constant 2 : index
    %c1_37 = arith.constant 1 : index
    %c0_38 = arith.constant 0 : index
    %c0_39 = arith.constant 0 : index
    %60 = vector.load %arg3[%c2_36, %c1_37, %c0_38, %c0_39] : memref<3x4x32x8xbf16, #tpu.memory_space<vmem>>, vector<1x1x32x8xbf16>
    %61 = vector.shape_cast %60 : vector<1x1x32x8xbf16> to vector<32x8xbf16>
    %cst_40 = arith.constant dense<0.000000e+00> : vector<32x8xf32>
    %62 = tpu.matmul %18, %61, %cst_40 {dimension_numbers = #tpu.dot_dimension_numbers<[1], [0], [0], [1], [0, 0, 1, 1], [], []>} : vector<32x32xbf16>, vector<32x8xbf16>, vector<32x8xf32> -> vector<32x8xf32>
    %63 = arith.truncf %56 : vector<32x8xf32> to vector<32x8xbf16>
    %64 = vector.shape_cast %63 : vector<32x8xbf16> to vector<2x16x8xbf16>
    %65 = arith.truncf %59 : vector<32x8xf32> to vector<32x8xbf16>
    %66 = vector.shape_cast %65 : vector<32x8xbf16> to vector<2x16x8xbf16>
    %67 = arith.truncf %62 : vector<32x8xf32> to vector<32x8xbf16>
    %68 = vector.shape_cast %67 : vector<32x8xbf16> to vector<2x16x8xbf16>
    "tpu.trace_start"() <{level = 10 : i32, message = "bnd,bmd->bnm"}> : () -> ()
    %cst_41 = arith.constant dense<0.000000e+00> : vector<2x16x16xf32>
    %69 = tpu.matmul %64, %66, %cst_41 {dimension_numbers = #tpu.dot_dimension_numbers<[2], [2], [1], [1], [0, 0, 0, 1, 1, 1], [0], [0]>} : vector<2x16x8xbf16>, vector<2x16x8xbf16>, vector<2x16x16xf32> -> vector<2x16x16xf32>
    "tpu.trace_stop"() : () -> ()
    %cst_42 = arith.constant dense<0xFF800000> : vector<2x16xf32>
    %70 = vector.multi_reduction <maximumf>, %69, %cst_42 [2] : vector<2x16x16xf32> to vector<2x16xf32>
    %71 = vector.shape_cast %70 : vector<2x16xf32> to vector<2x16x1xf32>
    %72 = vector.broadcast %71 : vector<2x16x1xf32> to vector<2x16x16xf32>
    %73 = arith.subf %69, %72 : vector<2x16x16xf32>
    %74 = math.exp %73 : vector<2x16x16xf32>
    %cst_43 = arith.constant dense<0.000000e+00> : vector<2x16xf32>
    %75 = vector.multi_reduction <add>, %74, %cst_43 [2] : vector<2x16x16xf32> to vector<2x16xf32>
    %76 = vector.shape_cast %75 : vector<2x16xf32> to vector<2x16x1xf32>
    %77 = tpu.reciprocal %76 {approx = true} : vector<2x16x1xf32> -> vector<2x16x1xf32>
    %78 = vector.broadcast %77 : vector<2x16x1xf32> to vector<2x16x16xf32>
    %79 = arith.mulf %74, %78 : vector<2x16x16xf32>
    %80 = arith.truncf %79 : vector<2x16x16xf32> to vector<2x16x16xbf16>
    "tpu.trace_start"() <{level = 10 : i32, message = "bnm,bmd->bnd"}> : () -> ()
    %cst_44 = arith.constant dense<0.000000e+00> : vector<2x16x8xf32>
    %81 = tpu.matmul %80, %68, %cst_44 {dimension_numbers = #tpu.dot_dimension_numbers<[2], [1], [1], [2], [0, 0, 0, 1, 1, 2], [0], [0]>} : vector<2x16x16xbf16>, vector<2x16x8xbf16>, vector<2x16x8xf32> -> vector<2x16x8xf32>
    "tpu.trace_stop"() : () -> ()
    %82 = arith.truncf %81 : vector<2x16x8xf32> to vector<2x16x8xbf16>
    %83 = vector.shape_cast %82 : vector<2x16x8xbf16> to vector<32x8xbf16>
    %c1_45 = arith.constant 1 : index
    %c0_46 = arith.constant 0 : index
    %c0_47 = arith.constant 0 : index
    %84 = vector.load %arg4[%c1_45, %c0_46, %c0_47] : memref<4x8x32xbf16, #tpu.memory_space<vmem>>, vector<1x8x32xbf16>
    %85 = vector.shape_cast %84 : vector<1x8x32xbf16> to vector<8x32xbf16>
    %cst_48 = arith.constant dense<0.000000e+00> : vector<32x32xf32>
    %86 = tpu.matmul %83, %85, %cst_48 {dimension_numbers = #tpu.dot_dimension_numbers<[1], [0], [0], [1], [0, 0, 1, 1], [], []>} : vector<32x8xbf16>, vector<8x32xbf16>, vector<32x32xf32> -> vector<32x32xf32>
    %87 = arith.addf %53, %86 : vector<32x32xf32>
    %c0_49 = arith.constant 0 : index
    %c2_50 = arith.constant 2 : index
    %c0_51 = arith.constant 0 : index
    %c0_52 = arith.constant 0 : index
    %88 = vector.load %arg3[%c0_49, %c2_50, %c0_51, %c0_52] : memref<3x4x32x8xbf16, #tpu.memory_space<vmem>>, vector<1x1x32x8xbf16>
    %89 = vector.shape_cast %88 : vector<1x1x32x8xbf16> to vector<32x8xbf16>
    %cst_53 = arith.constant dense<0.000000e+00> : vector<32x8xf32>
    %90 = tpu.matmul %18, %89, %cst_53 {dimension_numbers = #tpu.dot_dimension_numbers<[1], [0], [0], [1], [0, 0, 1, 1], [], []>} : vector<32x32xbf16>, vector<32x8xbf16>, vector<32x8xf32> -> vector<32x8xf32>
    %c1_54 = arith.constant 1 : index
    %c2_55 = arith.constant 2 : index
    %c0_56 = arith.constant 0 : index
    %c0_57 = arith.constant 0 : index
    %91 = vector.load %arg3[%c1_54, %c2_55, %c0_56, %c0_57] : memref<3x4x32x8xbf16, #tpu.memory_space<vmem>>, vector<1x1x32x8xbf16>
    %92 = vector.shape_cast %91 : vector<1x1x32x8xbf16> to vector<32x8xbf16>
    %cst_58 = arith.constant dense<0.000000e+00> : vector<32x8xf32>
    %93 = tpu.matmul %18, %92, %cst_58 {dimension_numbers = #tpu.dot_dimension_numbers<[1], [0], [0], [1], [0, 0, 1, 1], [], []>} : vector<32x32xbf16>, vector<32x8xbf16>, vector<32x8xf32> -> vector<32x8xf32>
    %c2_59 = arith.constant 2 : index
    %c2_60 = arith.constant 2 : index
    %c0_61 = arith.constant 0 : index
    %c0_62 = arith.constant 0 : index
    %94 = vector.load %arg3[%c2_59, %c2_60, %c0_61, %c0_62] : memref<3x4x32x8xbf16, #tpu.memory_space<vmem>>, vector<1x1x32x8xbf16>
    %95 = vector.shape_cast %94 : vector<1x1x32x8xbf16> to vector<32x8xbf16>
    %cst_63 = arith.constant dense<0.000000e+00> : vector<32x8xf32>
    %96 = tpu.matmul %18, %95, %cst_63 {dimension_numbers = #tpu.dot_dimension_numbers<[1], [0], [0], [1], [0, 0, 1, 1], [], []>} : vector<32x32xbf16>, vector<32x8xbf16>, vector<32x8xf32> -> vector<32x8xf32>
    %97 = arith.truncf %90 : vector<32x8xf32> to vector<32x8xbf16>
    %98 = vector.shape_cast %97 : vector<32x8xbf16> to vector<2x16x8xbf16>
    %99 = arith.truncf %93 : vector<32x8xf32> to vector<32x8xbf16>
    %100 = vector.shape_cast %99 : vector<32x8xbf16> to vector<2x16x8xbf16>
    %101 = arith.truncf %96 : vector<32x8xf32> to vector<32x8xbf16>
    %102 = vector.shape_cast %101 : vector<32x8xbf16> to vector<2x16x8xbf16>
    "tpu.trace_start"() <{level = 10 : i32, message = "bnd,bmd->bnm"}> : () -> ()
    %cst_64 = arith.constant dense<0.000000e+00> : vector<2x16x16xf32>
    %103 = tpu.matmul %98, %100, %cst_64 {dimension_numbers = #tpu.dot_dimension_numbers<[2], [2], [1], [1], [0, 0, 0, 1, 1, 1], [0], [0]>} : vector<2x16x8xbf16>, vector<2x16x8xbf16>, vector<2x16x16xf32> -> vector<2x16x16xf32>
    "tpu.trace_stop"() : () -> ()
    %cst_65 = arith.constant dense<0xFF800000> : vector<2x16xf32>
    %104 = vector.multi_reduction <maximumf>, %103, %cst_65 [2] : vector<2x16x16xf32> to vector<2x16xf32>
    %105 = vector.shape_cast %104 : vector<2x16xf32> to vector<2x16x1xf32>
    %106 = vector.broadcast %105 : vector<2x16x1xf32> to vector<2x16x16xf32>
    %107 = arith.subf %103, %106 : vector<2x16x16xf32>
    %108 = math.exp %107 : vector<2x16x16xf32>
    %cst_66 = arith.constant dense<0.000000e+00> : vector<2x16xf32>
    %109 = vector.multi_reduction <add>, %108, %cst_66 [2] : vector<2x16x16xf32> to vector<2x16xf32>
    %110 = vector.shape_cast %109 : vector<2x16xf32> to vector<2x16x1xf32>
    %111 = tpu.reciprocal %110 {approx = true} : vector<2x16x1xf32> -> vector<2x16x1xf32>
    %112 = vector.broadcast %111 : vector<2x16x1xf32> to vector<2x16x16xf32>
    %113 = arith.mulf %108, %112 : vector<2x16x16xf32>
    %114 = arith.truncf %113 : vector<2x16x16xf32> to vector<2x16x16xbf16>
    "tpu.trace_start"() <{level = 10 : i32, message = "bnm,bmd->bnd"}> : () -> ()
    %cst_67 = arith.constant dense<0.000000e+00> : vector<2x16x8xf32>
    %115 = tpu.matmul %114, %102, %cst_67 {dimension_numbers = #tpu.dot_dimension_numbers<[2], [1], [1], [2], [0, 0, 0, 1, 1, 2], [0], [0]>} : vector<2x16x16xbf16>, vector<2x16x8xbf16>, vector<2x16x8xf32> -> vector<2x16x8xf32>
    "tpu.trace_stop"() : () -> ()
    %116 = arith.truncf %115 : vector<2x16x8xf32> to vector<2x16x8xbf16>
    %117 = vector.shape_cast %116 : vector<2x16x8xbf16> to vector<32x8xbf16>
    %c2_68 = arith.constant 2 : index
    %c0_69 = arith.constant 0 : index
    %c0_70 = arith.constant 0 : index
    %118 = vector.load %arg4[%c2_68, %c0_69, %c0_70] : memref<4x8x32xbf16, #tpu.memory_space<vmem>>, vector<1x8x32xbf16>
    %119 = vector.shape_cast %118 : vector<1x8x32xbf16> to vector<8x32xbf16>
    %cst_71 = arith.constant dense<0.000000e+00> : vector<32x32xf32>
    %120 = tpu.matmul %117, %119, %cst_71 {dimension_numbers = #tpu.dot_dimension_numbers<[1], [0], [0], [1], [0, 0, 1, 1], [], []>} : vector<32x8xbf16>, vector<8x32xbf16>, vector<32x32xf32> -> vector<32x32xf32>
    %121 = arith.addf %87, %120 : vector<32x32xf32>
    %c0_72 = arith.constant 0 : index
    %c3 = arith.constant 3 : index
    %c0_73 = arith.constant 0 : index
    %c0_74 = arith.constant 0 : index
    %122 = vector.load %arg3[%c0_72, %c3, %c0_73, %c0_74] : memref<3x4x32x8xbf16, #tpu.memory_space<vmem>>, vector<1x1x32x8xbf16>
    %123 = vector.shape_cast %122 : vector<1x1x32x8xbf16> to vector<32x8xbf16>
    %cst_75 = arith.constant dense<0.000000e+00> : vector<32x8xf32>
    %124 = tpu.matmul %18, %123, %cst_75 {dimension_numbers = #tpu.dot_dimension_numbers<[1], [0], [0], [1], [0, 0, 1, 1], [], []>} : vector<32x32xbf16>, vector<32x8xbf16>, vector<32x8xf32> -> vector<32x8xf32>
    %c1_76 = arith.constant 1 : index
    %c3_77 = arith.constant 3 : index
    %c0_78 = arith.constant 0 : index
    %c0_79 = arith.constant 0 : index
    %125 = vector.load %arg3[%c1_76, %c3_77, %c0_78, %c0_79] : memref<3x4x32x8xbf16, #tpu.memory_space<vmem>>, vector<1x1x32x8xbf16>
    %126 = vector.shape_cast %125 : vector<1x1x32x8xbf16> to vector<32x8xbf16>
    %cst_80 = arith.constant dense<0.000000e+00> : vector<32x8xf32>
    %127 = tpu.matmul %18, %126, %cst_80 {dimension_numbers = #tpu.dot_dimension_numbers<[1], [0], [0], [1], [0, 0, 1, 1], [], []>} : vector<32x32xbf16>, vector<32x8xbf16>, vector<32x8xf32> -> vector<32x8xf32>
    %c2_81 = arith.constant 2 : index
    %c3_82 = arith.constant 3 : index
    %c0_83 = arith.constant 0 : index
    %c0_84 = arith.constant 0 : index
    %128 = vector.load %arg3[%c2_81, %c3_82, %c0_83, %c0_84] : memref<3x4x32x8xbf16, #tpu.memory_space<vmem>>, vector<1x1x32x8xbf16>
    %129 = vector.shape_cast %128 : vector<1x1x32x8xbf16> to vector<32x8xbf16>
    %cst_85 = arith.constant dense<0.000000e+00> : vector<32x8xf32>
    %130 = tpu.matmul %18, %129, %cst_85 {dimension_numbers = #tpu.dot_dimension_numbers<[1], [0], [0], [1], [0, 0, 1, 1], [], []>} : vector<32x32xbf16>, vector<32x8xbf16>, vector<32x8xf32> -> vector<32x8xf32>
    %131 = arith.truncf %124 : vector<32x8xf32> to vector<32x8xbf16>
    %132 = vector.shape_cast %131 : vector<32x8xbf16> to vector<2x16x8xbf16>
    %133 = arith.truncf %127 : vector<32x8xf32> to vector<32x8xbf16>
    %134 = vector.shape_cast %133 : vector<32x8xbf16> to vector<2x16x8xbf16>
    %135 = arith.truncf %130 : vector<32x8xf32> to vector<32x8xbf16>
    %136 = vector.shape_cast %135 : vector<32x8xbf16> to vector<2x16x8xbf16>
    "tpu.trace_start"() <{level = 10 : i32, message = "bnd,bmd->bnm"}> : () -> ()
    %cst_86 = arith.constant dense<0.000000e+00> : vector<2x16x16xf32>
    %137 = tpu.matmul %132, %134, %cst_86 {dimension_numbers = #tpu.dot_dimension_numbers<[2], [2], [1], [1], [0, 0, 0, 1, 1, 1], [0], [0]>} : vector<2x16x8xbf16>, vector<2x16x8xbf16>, vector<2x16x16xf32> -> vector<2x16x16xf32>
    "tpu.trace_stop"() : () -> ()
    %cst_87 = arith.constant dense<0xFF800000> : vector<2x16xf32>
    %138 = vector.multi_reduction <maximumf>, %137, %cst_87 [2] : vector<2x16x16xf32> to vector<2x16xf32>
    %139 = vector.shape_cast %138 : vector<2x16xf32> to vector<2x16x1xf32>
    %140 = vector.broadcast %139 : vector<2x16x1xf32> to vector<2x16x16xf32>
    %141 = arith.subf %137, %140 : vector<2x16x16xf32>
    %142 = math.exp %141 : vector<2x16x16xf32>
    %cst_88 = arith.constant dense<0.000000e+00> : vector<2x16xf32>
    %143 = vector.multi_reduction <add>, %142, %cst_88 [2] : vector<2x16x16xf32> to vector<2x16xf32>
    %144 = vector.shape_cast %143 : vector<2x16xf32> to vector<2x16x1xf32>
    %145 = tpu.reciprocal %144 {approx = true} : vector<2x16x1xf32> -> vector<2x16x1xf32>
    %146 = vector.broadcast %145 : vector<2x16x1xf32> to vector<2x16x16xf32>
    %147 = arith.mulf %142, %146 : vector<2x16x16xf32>
    %148 = arith.truncf %147 : vector<2x16x16xf32> to vector<2x16x16xbf16>
    "tpu.trace_start"() <{level = 10 : i32, message = "bnm,bmd->bnd"}> : () -> ()
    %cst_89 = arith.constant dense<0.000000e+00> : vector<2x16x8xf32>
    %149 = tpu.matmul %148, %136, %cst_89 {dimension_numbers = #tpu.dot_dimension_numbers<[2], [1], [1], [2], [0, 0, 0, 1, 1, 2], [0], [0]>} : vector<2x16x16xbf16>, vector<2x16x8xbf16>, vector<2x16x8xf32> -> vector<2x16x8xf32>
    "tpu.trace_stop"() : () -> ()
    %150 = arith.truncf %149 : vector<2x16x8xf32> to vector<2x16x8xbf16>
    %151 = vector.shape_cast %150 : vector<2x16x8xbf16> to vector<32x8xbf16>
    %c3_90 = arith.constant 3 : index
    %c0_91 = arith.constant 0 : index
    %c0_92 = arith.constant 0 : index
    %152 = vector.load %arg4[%c3_90, %c0_91, %c0_92] : memref<4x8x32xbf16, #tpu.memory_space<vmem>>, vector<1x8x32xbf16>
    %153 = vector.shape_cast %152 : vector<1x8x32xbf16> to vector<8x32xbf16>
    %cst_93 = arith.constant dense<0.000000e+00> : vector<32x32xf32>
    %154 = tpu.matmul %151, %153, %cst_93 {dimension_numbers = #tpu.dot_dimension_numbers<[1], [0], [0], [1], [0, 0, 1, 1], [], []>} : vector<32x8xbf16>, vector<8x32xbf16>, vector<32x32xf32> -> vector<32x32xf32>
    %155 = arith.addf %121, %154 : vector<32x32xf32>
    %156 = vector.broadcast %3 : vector<1x32xf32> to vector<32x32xf32>
    %157 = arith.addf %155, %156 : vector<32x32xf32>
    %158 = arith.addf %157, %0 : vector<32x32xf32>
    %159 = arith.mulf %158, %158 : vector<32x32xf32>
    %cst_94 = arith.constant dense<0.000000e+00> : vector<32xf32>
    %160 = vector.multi_reduction <add>, %159, %cst_94 [1] : vector<32x32xf32> to vector<32xf32>
    %161 = vector.shape_cast %160 : vector<32xf32> to vector<32x1xf32>
    %cst_95 = arith.constant 1.000000e-24 : f32
    %162 = vector.broadcast %cst_95 : f32 to vector<32x1xf32>
    %163 = arith.maximumf %161, %162 : vector<32x1xf32>
    %164 = math.rsqrt %163 : vector<32x1xf32>
    %165 = vector.broadcast %164 : vector<32x1xf32> to vector<32x32xf32>
    %166 = arith.mulf %158, %165 : vector<32x32xf32>
    %167 = vector.broadcast %4 : vector<1x32xf32> to vector<32x32xf32>
    %168 = arith.mulf %166, %167 : vector<32x32xf32>
    %169 = arith.truncf %168 : vector<32x32xf32> to vector<32x32xbf16>
    %c0_96 = arith.constant 0 : index
    %c0_97 = arith.constant 0 : index
    %170 = vector.load %arg5[%c0_96, %c0_97] : memref<32x32xbf16, #tpu.memory_space<vmem>>, vector<32x32xbf16>
    %cst_98 = arith.constant dense<0.000000e+00> : vector<32x32xf32>
    %171 = tpu.matmul %169, %170, %cst_98 {dimension_numbers = #tpu.dot_dimension_numbers<[1], [0], [0], [1], [0, 0, 1, 1], [], []>} : vector<32x32xbf16>, vector<32x32xbf16>, vector<32x32xf32> -> vector<32x32xf32>
    %172 = vector.broadcast %5 : vector<1x32xf32> to vector<32x32xf32>
    %173 = arith.addf %171, %172 : vector<32x32xf32>
    %174 = arith.negf %173 : vector<32x32xf32>
    %175 = math.exp %174 : vector<32x32xf32>
    %cst_99 = arith.constant 1.000000e+00 : f32
    %176 = vector.broadcast %cst_99 : f32 to vector<32x32xf32>
    %177 = arith.addf %176, %175 : vector<32x32xf32>
    %178 = arith.divf %176, %177 : vector<32x32xf32>
    %179 = arith.mulf %173, %178 : vector<32x32xf32>
    %180 = arith.truncf %179 : vector<32x32xf32> to vector<32x32xbf16>
    %c0_100 = arith.constant 0 : index
    %c0_101 = arith.constant 0 : index
    %181 = vector.load %arg6[%c0_100, %c0_101] : memref<32x32xbf16, #tpu.memory_space<vmem>>, vector<32x32xbf16>
    %cst_102 = arith.constant dense<0.000000e+00> : vector<32x32xf32>
    %182 = tpu.matmul %180, %181, %cst_102 {dimension_numbers = #tpu.dot_dimension_numbers<[1], [0], [0], [1], [0, 0, 1, 1], [], []>} : vector<32x32xbf16>, vector<32x32xbf16>, vector<32x32xf32> -> vector<32x32xf32>
    %183 = vector.broadcast %6 : vector<1x32xf32> to vector<32x32xf32>
    %184 = arith.addf %182, %183 : vector<32x32xf32>
    %185 = arith.addf %184, %168 : vector<32x32xf32>
    %186 = arith.mulf %185, %185 : vector<32x32xf32>
    %cst_103 = arith.constant dense<0.000000e+00> : vector<32xf32>
    %187 = vector.multi_reduction <add>, %186, %cst_103 [1] : vector<32x32xf32> to vector<32xf32>
    %188 = vector.shape_cast %187 : vector<32xf32> to vector<32x1xf32>
    %cst_104 = arith.constant 1.000000e-24 : f32
    %189 = vector.broadcast %cst_104 : f32 to vector<32x1xf32>
    %190 = arith.maximumf %188, %189 : vector<32x1xf32>
    %191 = math.rsqrt %190 : vector<32x1xf32>
    %192 = vector.broadcast %191 : vector<32x1xf32> to vector<32x32xf32>
    %193 = arith.mulf %185, %192 : vector<32x32xf32>
    %194 = vector.broadcast %7 : vector<1x32xf32> to vector<32x32xf32>
    %195 = arith.mulf %193, %194 : vector<32x32xf32>
    %c0_105 = arith.constant 0 : index
    %c0_106 = arith.constant 0 : index
    %196 = vector.load %arg7[%c0_105, %c0_106] : memref<32x32xf32, #tpu.memory_space<vmem>>, vector<32x32xf32>
    tpu.vector_store %arg7[%c0_105, %c0_106], %195 {strides = array<i32>} : memref<32x32xf32, #tpu.memory_space<vmem>>, vector<32x32xf32>,
    return
  }
  func.func @transform_0(%arg0: i32) -> (i32, i32) {
    %c0_i32 = arith.constant 0 : i32
    %c0_i32_0 = arith.constant 0 : i32
    %c0_i32_1 = arith.constant 0 : i32
    return %c0_i32, %c0_i32_0 : i32, i32
  }
  func.func @transform_1(%arg0: i32) -> (i32, i32) {
    %c0_i32 = arith.constant 0 : i32
    %c0_i32_0 = arith.constant 0 : i32
    %c0_i32_1 = arith.constant 0 : i32
    return %c0_i32, %c0_i32_0 : i32, i32
  }
  func.func @transform_2(%arg0: i32) -> (i32, i32, i32, i32) {
    %c0_i32 = arith.constant 0 : i32
    %c0_i32_0 = arith.constant 0 : i32
    %c0_i32_1 = arith.constant 0 : i32
    %c0_i32_2 = arith.constant 0 : i32
    %c0_i32_3 = arith.constant 0 : i32
    return %c0_i32, %c0_i32_0, %c0_i32_1, %c0_i32_2 : i32, i32, i32, i32
  }
  func.func @transform_3(%arg0: i32) -> (i32, i32, i32) {
    %c0_i32 = arith.constant 0 : i32
    %c0_i32_0 = arith.constant 0 : i32
    %c0_i32_1 = arith.constant 0 : i32
    %c0_i32_2 = arith.constant 0 : i32
    return %c0_i32, %c0_i32_0, %c0_i32_1 : i32, i32, i32
  }
  func.func @transform_4(%arg0: i32) -> (i32, i32) {
    %c0_i32 = arith.constant 0 : i32
    %c0_i32_0 = arith.constant 0 : i32
    %c0_i32_1 = arith.constant 0 : i32
    return %c0_i32, %c0_i32_0 : i32, i32
  }
  func.func @transform_5(%arg0: i32) -> (i32, i32) {
    %c0_i32 = arith.constant 0 : i32
    %c0_i32_0 = arith.constant 0 : i32
    %c0_i32_1 = arith.constant 0 : i32
    return %c0_i32, %c0_i32_0 : i32, i32
  }
  func.func @transform_6(%arg0: i32) -> (i32, i32) {
    %c0_i32 = arith.constant 0 : i32
    %c0_i32_0 = arith.constant 0 : i32
    %c0_i32_1 = arith.constant 0 : i32
    return %c0_i32, %c0_i32_0 : i32, i32
  }
}

</mosaic_0001>

<llo_original>
// kernel: tpu_custom_call.1
$region0: #{tpu_custom_call.1}
  #allocation0 [shape = 'u32[]', space=smem, size = 0x4, offset = 0x4, fixed_abs, tag = 'smem constant byte address 0x4 - core index']
  #allocation1 [shape = 'u32[144,128]{1,0:T(1,128)}', space=vmem, size = 0x12000, scoped, tag = 'internal scratch']
  %s0 = inlined_call_operand.vmem [shape: f32[32,32], index: 0, kind: input, shape index: {}]
  %s1 = inlined_call_operand.vmem [shape: f32[6,32], index: 1, kind: input, shape index: {}]
  %s2 = inlined_call_operand.vmem [shape: bf16[3,4,32,8], index: 2, kind: input, shape index: {}]
  %s3 = inlined_call_operand.vmem [shape: bf16[4,8,32], index: 3, kind: input, shape index: {}]
  %s4 = inlined_call_operand.vmem [shape: bf16[32,32], index: 4, kind: input, shape index: {}]
  %s5 = inlined_call_operand.vmem [shape: bf16[32,32], index: 5, kind: input, shape index: {}]
  %s6 = inlined_call_operand.hbm [shape: f32[32,32], index: 6, kind: output, shape index: {}]
  %s7 = sld [smem:[#allocation0]]
  $region34: #{tpu_custom_call.1} parent=0
    _
  %s9 = ssub.s32 1, %s7
  %s10 = scalar_select 0, %s9, %s7
  $region1: #{tpu_custom_call.1} parent=0
    #allocation2 [shape = 'u8[16384]{0}', space=vmem, size = 0x4000, scoped, tag = 'output window, operand 0, single buffered']
    #allocation3 [shape = 's32[1]{0}', space=sflag, size = 0x4, scoped, tag = 'scoped memory for tpu_custom_call.1']
    %11 = vsyncpa [#allocation3], 0
    // Predicated region
    $region2: #{tpu_custom_call.1} parent=1 // pred_check
      _
    $region3: #{tpu_custom_call.1} parent=1 // pred_check_branch
      %13 = sbr.rel (0) target = $region5
    $region4: #{tpu_custom_call.1} parent=1 // pred_region
      _
    $region5: #{tpu_custom_call.1} parent=1 // pred_fallthru
      _
    // Predicated region
    $region6: #{tpu_custom_call.1} parent=1 // pred_check
      _
    $region7: #{tpu_custom_call.1} parent=1 // pred_check_branch
      %15 = sbr.rel (0) target = $region9
    $region8: #{tpu_custom_call.1} parent=1 // pred_region
      _
    $region9: #{tpu_custom_call.1} parent=1 // pred_fallthru
      _
    // Predicated region
    $region10: #{tpu_custom_call.1} parent=1 // pred_check
      _
    $region11: #{tpu_custom_call.1} parent=1 // pred_check_branch
      %17 = sbr.rel (0) target = $region13
    $region12: #{tpu_custom_call.1} parent=1 // pred_region
      _
    $region13: #{tpu_custom_call.1} parent=1 // pred_fallthru
      _
    // Predicated region
    $region14: #{tpu_custom_call.1} parent=1 // pred_check
      _
    $region15: #{tpu_custom_call.1} parent=1 // pred_check_branch
      %19 = sbr.rel (0) target = $region17
    $region16: #{tpu_custom_call.1} parent=1 // pred_region
      _
    $region17: #{tpu_custom_call.1} parent=1 // pred_fallthru
      _
    // Predicated region
    $region18: #{tpu_custom_call.1} parent=1 // pred_check
      _
    $region19: #{tpu_custom_call.1} parent=1 // pred_check_branch
      %21 = sbr.rel (0) target = $region21
    $region20: #{tpu_custom_call.1} parent=1 // pred_region
      _
    $region21: #{tpu_custom_call.1} parent=1 // pred_fallthru
      _
    // Predicated region
    $region22: #{tpu_custom_call.1} parent=1 // pred_check
      _
    $region23: #{tpu_custom_call.1} parent=1 // pred_check_branch
      %23 = sbr.rel (0) target = $region25
    $region24: #{tpu_custom_call.1} parent=1 // pred_region
      _
    $region25: #{tpu_custom_call.1} parent=1 // pred_fallthru
      _
    %v25 = vld [vmem:[%s0] sm:$0xff]
    %v26 = vld [vmem:[%s0 + $0x8] sm:$0xff]
    %v27 = vld [vmem:[%s0 + $0x10] sm:$0xff]
    %v28 = vld [vmem:[%s0 + $0x18] sm:$0xff]
    %v29 = vld [vmem:[%s1] sm:$0x3f]
    %v30 = vmul.f32 %v25, %v25
    %v31 = vmul.f32 %v26, %v26
    %v32 = vmul.f32 %v27, %v27
    %v33 = vmul.f32 %v28, %v28
    %vm34 = vcmask 261120
    %v35 = vsel %vm34, %v30, 0.0
    %36 = vadd.xlane.f32.xlu0 %v35
    %v37 = vpop.xlane.xlu0 %36
    %v38 = vsel %vm34, %v31, 0.0
    %39 = vadd.xlane.f32.xlu0 %v38
    %v40 = vpop.xlane.xlu0 %39
    %v41 = vsel %vm34, %v32, 0.0
    %42 = vadd.xlane.f32.xlu0 %v41
    %v43 = vpop.xlane.xlu0 %42
    %v44 = vsel %vm34, %v33, 0.0
    %45 = vadd.xlane.f32.xlu0 %v44
    %v46 = vpop.xlane.xlu0 %45
    %v47 = vmax.f32 %v37, 1e-24
    %v48 = vmax.f32 %v40, 1e-24
    %v49 = vmax.f32 %v43, 1e-24
    %v50 = vmax.f32 %v46, 1e-24
    %v51 = vrsqrt.pop %v47
    %v52 = vrsqrt.pop %v48
    %v53 = vrsqrt.pop %v49
    %v54 = vrsqrt.pop %v50
    %v55 = vmul.f32 %v25, %v51
    %v56 = vmul.f32 %v26, %v52
    %v57 = vmul.f32 %v27, %v53
    %v58 = vmul.f32 %v28, %v54
    %v59 = vlaneseq
    %v60 = vshrl.u32 %v59, 7
    %v61 = vsub.s32 0, %v60
    %v62 = vrot.slane %v29, %v61
    %v63 = vmul.f32 %v55, %v62
    %v64 = vmul.f32 %v56, %v62
    %v65 = vmul.f32 %v57, %v62
    %v66 = vmul.f32 %v58, %v62
    %v67 = vpack.c.bf16 %v64, %v63
    %v68 = vpack.c.bf16 %v66, %v65
    %v69 = vld [vmem:[%s2] sm:$0xf]
    %v70 = vld [vmem:[%s2 + $0x4] sm:$0xf]
    %v71 = vld [vmem:[%s2 + $0x8] sm:$0xf]
    %v72 = vld [vmem:[%s2 + $0xc] sm:$0xf]
    %v77 = vunpack.c.l.b16 %v69
    %v78 = vunpack.c.l.b16 %v70
    %v79 = vunpack.c.l.b16 %v71
    %v80 = vunpack.c.l.b16 %v72
    %v81 = vpack.c.b16 %v78, %v77
    %v82 = vpack.c.b16 %v80, %v79
    %v86 = vsel %vm34, %v67, 0
    %v89 = vsel %vm34, %v68, 0
    %91 = vmatprep.subr.bf16.mxu0 0
    %92 = vmatpush1.bf16.msra.mxu0 0
    %93 = vmatprep.subr.bf16.mxu0 0
    %94 = vmatpush1.bf16.msra.mxu0 0
    %95 = vmatprep.subr.bf16.mxu0 0
    %96 = vmatpush1.bf16.msra.mxu0 0
    %97 = vmatprep.subr.bf16.mxu0 0
    %98 = vmatpush1.bf16.msra.mxu0 0
    %99 = vmatprep.subr.bf16.mxu0 0
    %100 = vmatpush1.bf16.msra.mxu0 0
    %101 = vmatprep.subr.bf16.mxu0 0
    %102 = vmatpush1.bf16.msra.mxu0 0
    %103 = vmatprep.subr.bf16.mxu0 0
    %104 = vmatpush1.bf16.msra.mxu0 %v82
    %105 = vmatprep.subr.bf16.mxu0 0
    %106 = vmatpush1.bf16.msra.mxu0 %v81
    %107 = vmatprep.subr.bf16.mxu0 0
    %108 = vmatpush2.bf16.msra.mxu0 0
    %109 = vmatprep.subr.bf16.mxu0 0
    %110 = vmatpush2.bf16.msra.mxu0 0
    %111 = vmatprep.subr.bf16.mxu0 0
    %112 = vmatpush2.bf16.msra.mxu0 0
    %113 = vmatprep.subr.bf16.mxu0 0
    %114 = vmatpush2.bf16.msra.mxu0 0
    %115 = vmatprep.subr.bf16.mxu0 0
    %116 = vmatpush2.bf16.msra.mxu0 0
    %117 = vmatprep.subr.bf16.mxu0 0
    %118 = vmatpush2.bf16.msra.mxu0 0
    %119 = vmatprep.subr.bf16.mxu0 0
    %120 = vmatpush2.bf16.msra.mxu0 0
    %121 = vmatprep.subr.bf16.mxu0 0
    %122 = vmatpush2.bf16.msra.mxu0 0
    %123 = vmatprep.mubr.bf16.mxu0 0
    %124 = vmatmul.mubr.bf16.gmra.mxu0 %v86
    %v125 = vpop.f32.mrf.mxu0
    %v126 = vadd.f32 0.0, %v125
    %v127 = vpop.f32.mrf.mxu0
    %v128 = vpop.f32.mrf.mxu0
    %v129 = vadd.f32 0.0, %v128
    %v130 = vpop.f32.mrf.mxu0
    %131 = vmatprep.mubr.bf16.mxu0 0
    %132 = vmatmul.mubr.bf16.gmra.mxu0 %v89
    %v133 = vpop.f32.mrf.mxu0
    %v134 = vadd.f32 0.0, %v133
    %v135 = vpop.f32.mrf.mxu0
    %v136 = vpop.f32.mrf.mxu0
    %v137 = vadd.f32 0.0, %v136
    %v138 = vpop.f32.mrf.mxu0
    %139 = vdwg.mxu0
    %s140 = scalar_lea.vmem %s2, 64
    %v141 = vld [vmem:[%s140] sm:$0xf]
    %v142 = vld [vmem:[%s140 + $0x4] sm:$0xf]
    %v143 = vld [vmem:[%s140 + $0x8] sm:$0xf]
    %v144 = vld [vmem:[%s140 + $0xc] sm:$0xf]
    %v149 = vunpack.c.l.b16 %v141
    %v150 = vunpack.c.l.b16 %v142
    %v151 = vunpack.c.l.b16 %v143
    %v152 = vunpack.c.l.b16 %v144
    %v153 = vpack.c.b16 %v150, %v149
    %v154 = vpack.c.b16 %v152, %v151
    %157 = vmatprep.subr.bf16.mxu0 0
    %158 = vmatpush1.bf16.msra.mxu0 0
    %159 = vmatprep.subr.bf16.mxu0 0
    %160 = vmatpush1.bf16.msra.mxu0 0
    %161 = vmatprep.subr.bf16.mxu0 0
    %162 = vmatpush1.bf16.msra.mxu0 0
    %163 = vmatprep.subr.bf16.mxu0 0
    %164 = vmatpush1.bf16.msra.mxu0 0
    %165 = vmatprep.subr.bf16.mxu0 0
    %166 = vmatpush1.bf16.msra.mxu0 0
    %167 = vmatprep.subr.bf16.mxu0 0
    %168 = vmatpush1.bf16.msra.mxu0 0
    %169 = vmatprep.subr.bf16.mxu0 0
    %170 = vmatpush1.bf16.msra.mxu0 %v154
    %171 = vmatprep.subr.bf16.mxu0 0
    %172 = vmatpush1.bf16.msra.mxu0 %v153
    %173 = vmatprep.subr.bf16.mxu0 0
    %174 = vmatpush2.bf16.msra.mxu0 0
    %175 = vmatprep.subr.bf16.mxu0 0
    %176 = vmatpush2.bf16.msra.mxu0 0
    %177 = vmatprep.subr.bf16.mxu0 0
    %178 = vmatpush2.bf16.msra.mxu0 0
    %179 = vmatprep.subr.bf16.mxu0 0
    %180 = vmatpush2.bf16.msra.mxu0 0
    %181 = vmatprep.subr.bf16.mxu0 0
    %182 = vmatpush2.bf16.msra.mxu0 0
    %183 = vmatprep.subr.bf16.mxu0 0
    %184 = vmatpush2.bf16.msra.mxu0 0
    %185 = vmatprep.subr.bf16.mxu0 0
    %186 = vmatpush2.bf16.msra.mxu0 0
    %187 = vmatprep.subr.bf16.mxu0 0
    %188 = vmatpush2.bf16.msra.mxu0 0
    %189 = vmatprep.mubr.bf16.mxu0 0
    %190 = vmatmul.mubr.bf16.gmra.mxu0 %v86
    %v191 = vpop.f32.mrf.mxu0
    %v192 = vadd.f32 0.0, %v191
    %v193 = vpop.f32.mrf.mxu0
    %v194 = vpop.f32.mrf.mxu0
    %v195 = vadd.f32 0.0, %v194
    %v196 = vpop.f32.mrf.mxu0
    %197 = vmatprep.mubr.bf16.mxu0 0
    %198 = vmatmul.mubr.bf16.gmra.mxu0 %v89
    %v199 = vpop.f32.mrf.mxu0
    %v200 = vadd.f32 0.0, %v199
    %v201 = vpop.f32.mrf.mxu0
    %v202 = vpop.f32.mrf.mxu0
    %v203 = vadd.f32 0.0, %v202
    %v204 = vpop.f32.mrf.mxu0
    %205 = vdwg.mxu0
    %s206 = scalar_lea.vmem %s2, 128
    %v207 = vld [vmem:[%s206] sm:$0xf]
    %v208 = vld [vmem:[%s206 + $0x4] sm:$0xf]
    %v209 = vld [vmem:[%s206 + $0x8] sm:$0xf]
    %v210 = vld [vmem:[%s206 + $0xc] sm:$0xf]
    %v215 = vunpack.c.l.b16 %v207
    %v216 = vunpack.c.l.b16 %v208
    %v217 = vunpack.c.l.b16 %v209
    %v218 = vunpack.c.l.b16 %v210
    %v219 = vpack.c.b16 %v216, %v215
    %v220 = vpack.c.b16 %v218, %v217
    %223 = vmatprep.subr.bf16.mxu0 0
    %224 = vmatpush1.bf16.msra.mxu0 0
    %225 = vmatprep.subr.bf16.mxu0 0
    %226 = vmatpush1.bf16.msra.mxu0 0
    %227 = vmatprep.subr.bf16.mxu0 0
    %228 = vmatpush1.bf16.msra.mxu0 0
    %229 = vmatprep.subr.bf16.mxu0 0
    %230 = vmatpush1.bf16.msra.mxu0 0
    %231 = vmatprep.subr.bf16.mxu0 0
    %232 = vmatpush1.bf16.msra.mxu0 0
    %233 = vmatprep.subr.bf16.mxu0 0
    %234 = vmatpush1.bf16.msra.mxu0 0
    %235 = vmatprep.subr.bf16.mxu0 0
    %236 = vmatpush1.bf16.msra.mxu0 %v220
    %237 = vmatprep.subr.bf16.mxu0 0
    %238 = vmatpush1.bf16.msra.mxu0 %v219
    %239 = vmatprep.subr.bf16.mxu0 0
    %240 = vmatpush2.bf16.msra.mxu0 0
    %241 = vmatprep.subr.bf16.mxu0 0
    %242 = vmatpush2.bf16.msra.mxu0 0
    %243 = vmatprep.subr.bf16.mxu0 0
    %244 = vmatpush2.bf16.msra.mxu0 0
    %245 = vmatprep.subr.bf16.mxu0 0
    %246 = vmatpush2.bf16.msra.mxu0 0
    %247 = vmatprep.subr.bf16.mxu0 0
    %248 = vmatpush2.bf16.msra.mxu0 0
    %249 = vmatprep.subr.bf16.mxu0 0
    %250 = vmatpush2.bf16.msra.mxu0 0
    %251 = vmatprep.subr.bf16.mxu0 0
    %252 = vmatpush2.bf16.msra.mxu0 0
    %253 = vmatprep.subr.bf16.mxu0 0
    %254 = vmatpush2.bf16.msra.mxu0 0
    %255 = vmatprep.mubr.bf16.mxu0 0
    %256 = vmatmul.mubr.bf16.gmra.mxu0 %v86
    %v257 = vpop.f32.mrf.mxu0
    %v258 = vadd.f32 0.0, %v257
    %v259 = vpop.f32.mrf.mxu0
    %v260 = vpop.f32.mrf.mxu0
    %v261 = vadd.f32 0.0, %v260
    %v262 = vpop.f32.mrf.mxu0
    %263 = vmatprep.mubr.bf16.mxu0 0
    %264 = vmatmul.mubr.bf16.gmra.mxu0 %v89
    %v265 = vpop.f32.mrf.mxu0
    %v266 = vadd.f32 0.0, %v265
    %v267 = vpop.f32.mrf.mxu0
    %v268 = vpop.f32.mrf.mxu0
    %v269 = vadd.f32 0.0, %v268
    %v270 = vpop.f32.mrf.mxu0
    %271 = vdwg.mxu0
    %v272 = vpack.c.bf16 %v129, %v126
    %v273 = vpack.c.bf16 %v137, %v134
    %v274 = vpack.c.bf16 %v195, %v192
    %v275 = vpack.c.bf16 %v203, %v200
    %v276 = vpack.c.bf16 %v261, %v258
    %v277 = vpack.c.bf16 %v269, %v266
    %vm278 = vcmask 64512
    %v280 = vsel %vm278, %v272, 0
    %v283 = vsel %vm278, %v274, 0
    %285 = vmatprep.subr.bf16.mxu0 0
    %286 = vmatpush1.bf16.xpose.msra.mxu0 0
    %287 = vmatprep.subr.bf16.mxu0 0
    %288 = vmatpush1.bf16.xpose.msra.mxu0 0
    %289 = vmatprep.subr.bf16.mxu0 0
    %290 = vmatpush1.bf16.xpose.msra.mxu0 0
    %291 = vmatprep.subr.bf16.mxu0 0
    %292 = vmatpush1.bf16.xpose.msra.mxu0 0
    %293 = vmatprep.subr.bf16.mxu0 0
    %294 = vmatpush1.bf16.xpose.msra.mxu0 0
    %295 = vmatprep.subr.bf16.mxu0 0
    %296 = vmatpush1.bf16.xpose.msra.mxu0 0
    %297 = vmatprep.subr.bf16.mxu0 0
    %298 = vmatpush1.bf16.xpose.msra.mxu0 0
    %299 = vmatprep.subr.bf16.mxu0 0
    %300 = vmatpush1.bf16.xpose.msra.mxu0 %v283
    %301 = vmatprep.subr.bf16.mxu0 0
    %302 = vmatpush2.bf16.xpose.msra.mxu0 0
    %303 = vmatprep.subr.bf16.mxu0 0
    %304 = vmatpush2.bf16.xpose.msra.mxu0 0
    %305 = vmatprep.subr.bf16.mxu0 0
    %306 = vmatpush2.bf16.xpose.msra.mxu0 0
    %307 = vmatprep.subr.bf16.mxu0 0
    %308 = vmatpush2.bf16.xpose.msra.mxu0 0
    %309 = vmatprep.subr.bf16.mxu0 0
    %310 = vmatpush2.bf16.xpose.msra.mxu0 0
    %311 = vmatprep.subr.bf16.mxu0 0
    %312 = vmatpush2.bf16.xpose.msra.mxu0 0
    %313 = vmatprep.subr.bf16.mxu0 0
    %314 = vmatpush2.bf16.xpose.msra.mxu0 0
    %315 = vmatprep.subr.bf16.mxu0 0
    %316 = vmatpush2.bf16.xpose.msra.mxu0 0
    %317 = vmatprep.mubr.bf16.mxu0 0
    %318 = vmatmul.mubr.bf16.gmra.mxu0 %v280
    %v319 = vpop.f32.mrf.mxu0
    %v320 = vadd.f32 0.0, %v319
    %v321 = vpop.f32.mrf.mxu0
    %v322 = vpop.f32.mrf.mxu0
    %v323 = vadd.f32 0.0, %v322
    %v324 = vpop.f32.mrf.mxu0
    %325 = vdwg.mxu0
    %v327 = vsel %vm278, %v273, 0
    %v330 = vsel %vm278, %v275, 0
    %332 = vmatprep.subr.bf16.mxu0 0
    %333 = vmatpush1.bf16.xpose.msra.mxu0 0
    %334 = vmatprep.subr.bf16.mxu0 0
    %335 = vmatpush1.bf16.xpose.msra.mxu0 0
    %336 = vmatprep.subr.bf16.mxu0 0
    %337 = vmatpush1.bf16.xpose.msra.mxu0 0
    %338 = vmatprep.subr.bf16.mxu0 0
    %339 = vmatpush1.bf16.xpose.msra.mxu0 0
    %340 = vmatprep.subr.bf16.mxu0 0
    %341 = vmatpush1.bf16.xpose.msra.mxu0 0
    %342 = vmatprep.subr.bf16.mxu0 0
    %343 = vmatpush1.bf16.xpose.msra.mxu0 0
    %344 = vmatprep.subr.bf16.mxu0 0
    %345 = vmatpush1.bf16.xpose.msra.mxu0 0
    %346 = vmatprep.subr.bf16.mxu0 0
    %347 = vmatpush1.bf16.xpose.msra.mxu0 %v330
    %348 = vmatprep.subr.bf16.mxu0 0
    %349 = vmatpush2.bf16.xpose.msra.mxu0 0
    %350 = vmatprep.subr.bf16.mxu0 0
    %351 = vmatpush2.bf16.xpose.msra.mxu0 0
    %352 = vmatprep.subr.bf16.mxu0 0
    %353 = vmatpush2.bf16.xpose.msra.mxu0 0
    %354 = vmatprep.subr.bf16.mxu0 0
    %355 = vmatpush2.bf16.xpose.msra.mxu0 0
    %356 = vmatprep.subr.bf16.mxu0 0
    %357 = vmatpush2.bf16.xpose.msra.mxu0 0
    %358 = vmatprep.subr.bf16.mxu0 0
    %359 = vmatpush2.bf16.xpose.msra.mxu0 0
    %360 = vmatprep.subr.bf16.mxu0 0
    %361 = vmatpush2.bf16.xpose.msra.mxu0 0
    %362 = vmatprep.subr.bf16.mxu0 0
    %363 = vmatpush2.bf16.xpose.msra.mxu0 0
    %364 = vmatprep.mubr.bf16.mxu0 0
    %365 = vmatmul.mubr.bf16.gmra.mxu0 %v327
    %v366 = vpop.f32.mrf.mxu0
    %v367 = vadd.f32 0.0, %v366
    %v368 = vpop.f32.mrf.mxu0
    %v369 = vpop.f32.mrf.mxu0
    %v370 = vadd.f32 0.0, %v369
    %v371 = vpop.f32.mrf.mxu0
    %372 = vdwg.mxu0
    %vm373 = vcmask 130048
    %v374 = vsel %vm373, %v320, -inf
    %375 = vmax.xlane.f32.xlu0 %v374
    %v376 = vpop.xlane.xlu0 %375
    %v377 = vsel %vm373, %v323, -inf
    %378 = vmax.xlane.f32.xlu0 %v377
    %v379 = vpop.xlane.xlu0 %378
    %v380 = vsel %vm373, %v367, -inf
    %381 = vmax.xlane.f32.xlu0 %v380
    %v382 = vpop.xlane.xlu0 %381
    %v383 = vsel %vm373, %v370, -inf
    %384 = vmax.xlane.f32.xlu0 %v383
    %v385 = vpop.xlane.xlu0 %384
    %v386 = vsub.f32 %v320, %v376
    %v387 = vsub.f32 %v323, %v379
    %v388 = vsub.f32 %v367, %v382
    %v389 = vsub.f32 %v370, %v385
    %v390 = vmul.f32 %v386, 1.442695
    %v391 = vpow.pop %v390
    %v392 = vmul.f32 %v387, 1.442695
    %v393 = vpow.pop %v392
    %v394 = vmul.f32 %v388, 1.442695
    %v395 = vpow.pop %v394
    %v396 = vmul.f32 %v389, 1.442695
    %v397 = vpow.pop %v396
    %v398 = vsel %vm373, %v391, 0.0
    %399 = vadd.xlane.f32.xlu0 %v398
    %v400 = vpop.xlane.xlu0 %399
    %v401 = vsel %vm373, %v393, 0.0
    %402 = vadd.xlane.f32.xlu0 %v401
    %v403 = vpop.xlane.xlu0 %402
    %v404 = vsel %vm373, %v395, 0.0
    %405 = vadd.xlane.f32.xlu0 %v404
    %v406 = vpop.xlane.xlu0 %405
    %v407 = vsel %vm373, %v397, 0.0
    %408 = vadd.xlane.f32.xlu0 %v407
    %v409 = vpop.xlane.xlu0 %408
    %v410 = vrcp.pop %v400
    %v411 = vrcp.pop %v403
    %v412 = vrcp.pop %v406
    %v413 = vrcp.pop %v409
    %v414 = vmul.f32 %v391, %v410
    %v415 = vmul.f32 %v393, %v411
    %v416 = vmul.f32 %v395, %v412
    %v417 = vmul.f32 %v397, %v413
    %v418 = vpack.c.bf16 %v415, %v414
    %v419 = vpack.c.bf16 %v417, %v416
    %v421 = vsel %vm373, %v418, 0
    %423 = vmatprep.subr.bf16.mxu0 0
    %424 = vmatpush1.bf16.msra.mxu0 0
    %425 = vmatprep.subr.bf16.mxu0 0
    %426 = vmatpush1.bf16.msra.mxu0 0
    %427 = vmatprep.subr.bf16.mxu0 0
    %428 = vmatpush1.bf16.msra.mxu0 0
    %429 = vmatprep.subr.bf16.mxu0 0
    %430 = vmatpush1.bf16.msra.mxu0 0
    %431 = vmatprep.subr.bf16.mxu0 0
    %432 = vmatpush1.bf16.msra.mxu0 0
    %433 = vmatprep.subr.bf16.mxu0 0
    %434 = vmatpush1.bf16.msra.mxu0 0
    %435 = vmatprep.subr.bf16.mxu0 0
    %436 = vmatpush1.bf16.msra.mxu0 0
    %437 = vmatprep.subr.bf16.mxu0 0
    %438 = vmatpush1.bf16.msra.mxu0 %v276
    %439 = vmatprep.subr.bf16.mxu0 0
    %440 = vmatpush2.bf16.msra.mxu0 0
    %441 = vmatprep.subr.bf16.mxu0 0
    %442 = vmatpush2.bf16.msra.mxu0 0
    %443 = vmatprep.subr.bf16.mxu0 0
    %444 = vmatpush2.bf16.msra.mxu0 0
    %445 = vmatprep.subr.bf16.mxu0 0
    %446 = vmatpush2.bf16.msra.mxu0 0
    %447 = vmatprep.subr.bf16.mxu0 0
    %448 = vmatpush2.bf16.msra.mxu0 0
    %449 = vmatprep.subr.bf16.mxu0 0
    %450 = vmatpush2.bf16.msra.mxu0 0
    %451 = vmatprep.subr.bf16.mxu0 0
    %452 = vmatpush2.bf16.msra.mxu0 0
    %453 = vmatprep.subr.bf16.mxu0 0
    %454 = vmatpush2.bf16.msra.mxu0 0
    %455 = vmatprep.mubr.bf16.mxu0 0
    %456 = vmatmul.mubr.bf16.gmra.mxu0 %v421
    %v457 = vpop.f32.mrf.mxu0
    %v458 = vadd.f32 0.0, %v457
    %v459 = vpop.f32.mrf.mxu0
    %v460 = vpop.f32.mrf.mxu0
    %v461 = vadd.f32 0.0, %v460
    %v462 = vpop.f32.mrf.mxu0
    %463 = vdwg.mxu0
    %v465 = vsel %vm373, %v419, 0
    %467 = vmatprep.subr.bf16.mxu0 0
    %468 = vmatpush1.bf16.msra.mxu0 0
    %469 = vmatprep.subr.bf16.mxu0 0
    %470 = vmatpush1.bf16.msra.mxu0 0
    %471 = vmatprep.subr.bf16.mxu0 0
    %472 = vmatpush1.bf16.msra.mxu0 0
    %473 = vmatprep.subr.bf16.mxu0 0
    %474 = vmatpush1.bf16.msra.mxu0 0
    %475 = vmatprep.subr.bf16.mxu0 0
    %476 = vmatpush1.bf16.msra.mxu0 0
    %477 = vmatprep.subr.bf16.mxu0 0
    %478 = vmatpush1.bf16.msra.mxu0 0
    %479 = vmatprep.subr.bf16.mxu0 0
    %480 = vmatpush1.bf16.msra.mxu0 0
    %481 = vmatprep.subr.bf16.mxu0 0
    %482 = vmatpush1.bf16.msra.mxu0 %v277
    %483 = vmatprep.subr.bf16.mxu0 0
    %484 = vmatpush2.bf16.msra.mxu0 0
    %485 = vmatprep.subr.bf16.mxu0 0
    %486 = vmatpush2.bf16.msra.mxu0 0
    %487 = vmatprep.subr.bf16.mxu0 0
    %488 = vmatpush2.bf16.msra.mxu0 0
    %489 = vmatprep.subr.bf16.mxu0 0
    %490 = vmatpush2.bf16.msra.mxu0 0
    %491 = vmatprep.subr.bf16.mxu0 0
    %492 = vmatpush2.bf16.msra.mxu0 0
    %493 = vmatprep.subr.bf16.mxu0 0
    %494 = vmatpush2.bf16.msra.mxu0 0
    %495 = vmatprep.subr.bf16.mxu0 0
    %496 = vmatpush2.bf16.msra.mxu0 0
    %497 = vmatprep.subr.bf16.mxu0 0
    %498 = vmatpush2.bf16.msra.mxu0 0
    %499 = vmatprep.mubr.bf16.mxu0 0
    %500 = vmatmul.mubr.bf16.gmra.mxu0 %v465
    %v501 = vpop.f32.mrf.mxu0
    %v502 = vadd.f32 0.0, %v501
    %v503 = vpop.f32.mrf.mxu0
    %v504 = vpop.f32.mrf.mxu0
    %v505 = vadd.f32 0.0, %v504
    %v506 = vpop.f32.mrf.mxu0
    %507 = vdwg.mxu0
    %v508 = vpack.c.bf16 %v461, %v458
    %v509 = vpack.c.bf16 %v505, %v502
    %v510 = vld [vmem:[%s3] sm:$0xf]
    %s511 = scalar_lea.vmem %s2, 16
    %v512 = vld [vmem:[%s511] sm:$0xf]
    %v513 = vld [vmem:[%s511 + $0x4] sm:$0xf]
    %v514 = vld [vmem:[%s511 + $0x8] sm:$0xf]
    %v515 = vld [vmem:[%s511 + $0xc] sm:$0xf]
    %v520 = vunpack.c.l.b16 %v512
    %v521 = vunpack.c.l.b16 %v513
    %v522 = vunpack.c.l.b16 %v514
    %v523 = vunpack.c.l.b16 %v515
    %v524 = vpack.c.b16 %v521, %v520
    %v525 = vpack.c.b16 %v523, %v522
    %528 = vmatprep.subr.bf16.mxu0 0
    %529 = vmatpush1.bf16.msra.mxu0 0
    %530 = vmatprep.subr.bf16.mxu0 0
    %531 = vmatpush1.bf16.msra.mxu0 0
    %532 = vmatprep.subr.bf16.mxu0 0
    %533 = vmatpush1.bf16.msra.mxu0 0
    %534 = vmatprep.subr.bf16.mxu0 0
    %535 = vmatpush1.bf16.msra.mxu0 0
    %536 = vmatprep.subr.bf16.mxu0 0
    %537 = vmatpush1.bf16.msra.mxu0 0
    %538 = vmatprep.subr.bf16.mxu0 0
    %539 = vmatpush1.bf16.msra.mxu0 0
    %540 = vmatprep.subr.bf16.mxu0 0
    %541 = vmatpush1.bf16.msra.mxu0 %v525
    %542 = vmatprep.subr.bf16.mxu0 0
    %543 = vmatpush1.bf16.msra.mxu0 %v524
    %544 = vmatprep.subr.bf16.mxu0 0
    %545 = vmatpush2.bf16.msra.mxu0 0
    %546 = vmatprep.subr.bf16.mxu0 0
    %547 = vmatpush2.bf16.msra.mxu0 0
    %548 = vmatprep.subr.bf16.mxu0 0
    %549 = vmatpush2.bf16.msra.mxu0 0
    %550 = vmatprep.subr.bf16.mxu0 0
    %551 = vmatpush2.bf16.msra.mxu0 0
    %552 = vmatprep.subr.bf16.mxu0 0
    %553 = vmatpush2.bf16.msra.mxu0 0
    %554 = vmatprep.subr.bf16.mxu0 0
    %555 = vmatpush2.bf16.msra.mxu0 0
    %556 = vmatprep.subr.bf16.mxu0 0
    %557 = vmatpush2.bf16.msra.mxu0 0
    %558 = vmatprep.subr.bf16.mxu0 0
    %559 = vmatpush2.bf16.msra.mxu0 0
    %560 = vmatprep.mubr.bf16.mxu0 0
    %561 = vmatmul.mubr.bf16.gmra.mxu0 %v86
    %v562 = vpop.f32.mrf.mxu0
    %v563 = vadd.f32 0.0, %v562
    %v564 = vpop.f32.mrf.mxu0
    %v565 = vpop.f32.mrf.mxu0
    %v566 = vadd.f32 0.0, %v565
    %v567 = vpop.f32.mrf.mxu0
    %568 = vmatprep.mubr.bf16.mxu0 0
    %569 = vmatmul.mubr.bf16.gmra.mxu0 %v89
    %v570 = vpop.f32.mrf.mxu0
    %v571 = vadd.f32 0.0, %v570
    %v572 = vpop.f32.mrf.mxu0
    %v573 = vpop.f32.mrf.mxu0
    %v574 = vadd.f32 0.0, %v573
    %v575 = vpop.f32.mrf.mxu0
    %576 = vdwg.mxu0
    %s577 = scalar_lea.vmem %s2, 80
    %v578 = vld [vmem:[%s577] sm:$0xf]
    %v579 = vld [vmem:[%s577 + $0x4] sm:$0xf]
    %v580 = vld [vmem:[%s577 + $0x8] sm:$0xf]
    %v581 = vld [vmem:[%s577 + $0xc] sm:$0xf]
    %v586 = vunpack.c.l.b16 %v578
    %v587 = vunpack.c.l.b16 %v579
    %v588 = vunpack.c.l.b16 %v580
    %v589 = vunpack.c.l.b16 %v581
    %v590 = vpack.c.b16 %v587, %v586
    %v591 = vpack.c.b16 %v589, %v588
    %594 = vmatprep.subr.bf16.mxu0 0
    %595 = vmatpush1.bf16.msra.mxu0 0
    %596 = vmatprep.subr.bf16.mxu0 0
    %597 = vmatpush1.bf16.msra.mxu0 0
    %598 = vmatprep.subr.bf16.mxu0 0
    %599 = vmatpush1.bf16.msra.mxu0 0
    %600 = vmatprep.subr.bf16.mxu0 0
    %601 = vmatpush1.bf16.msra.mxu0 0
    %602 = vmatprep.subr.bf16.mxu0 0
    %603 = vmatpush1.bf16.msra.mxu0 0
    %604 = vmatprep.subr.bf16.mxu0 0
    %605 = vmatpush1.bf16.msra.mxu0 0
    %606 = vmatprep.subr.bf16.mxu0 0
    %607 = vmatpush1.bf16.msra.mxu0 %v591
    %608 = vmatprep.subr.bf16.mxu0 0
    %609 = vmatpush1.bf16.msra.mxu0 %v590
    %610 = vmatprep.subr.bf16.mxu0 0
    %611 = vmatpush2.bf16.msra.mxu0 0
    %612 = vmatprep.subr.bf16.mxu0 0
    %613 = vmatpush2.bf16.msra.mxu0 0
    %614 = vmatprep.subr.bf16.mxu0 0
    %615 = vmatpush2.bf16.msra.mxu0 0
    %616 = vmatprep.subr.bf16.mxu0 0
    %617 = vmatpush2.bf16.msra.mxu0 0
    %618 = vmatprep.subr.bf16.mxu0 0
    %619 = vmatpush2.bf16.msra.mxu0 0
    %620 = vmatprep.subr.bf16.mxu0 0
    %621 = vmatpush2.bf16.msra.mxu0 0
    %622 = vmatprep.subr.bf16.mxu0 0
    %623 = vmatpush2.bf16.msra.mxu0 0
    %624 = vmatprep.subr.bf16.mxu0 0
    %625 = vmatpush2.bf16.msra.mxu0 0
    %626 = vmatprep.mubr.bf16.mxu0 0
    %627 = vmatmul.mubr.bf16.gmra.mxu0 %v86
    %v628 = vpop.f32.mrf.mxu0
    %v629 = vadd.f32 0.0, %v628
    %v630 = vpop.f32.mrf.mxu0
    %v631 = vpop.f32.mrf.mxu0
    %v632 = vadd.f32 0.0, %v631
    %v633 = vpop.f32.mrf.mxu0
    %634 = vmatprep.mubr.bf16.mxu0 0
    %635 = vmatmul.mubr.bf16.gmra.mxu0 %v89
    %v636 = vpop.f32.mrf.mxu0
    %v637 = vadd.f32 0.0, %v636
    %v638 = vpop.f32.mrf.mxu0
    %v639 = vpop.f32.mrf.mxu0
    %v640 = vadd.f32 0.0, %v639
    %v641 = vpop.f32.mrf.mxu0
    %642 = vdwg.mxu0
    %s643 = scalar_lea.vmem %s2, 144
    %v644 = vld [vmem:[%s643] sm:$0xf]
    %v645 = vld [vmem:[%s643 + $0x4] sm:$0xf]
    %v646 = vld [vmem:[%s643 + $0x8] sm:$0xf]
    %v647 = vld [vmem:[%s643 + $0xc] sm:$0xf]
    %v652 = vunpack.c.l.b16 %v644
    %v653 = vunpack.c.l.b16 %v645
    %v654 = vunpack.c.l.b16 %v646
    %v655 = vunpack.c.l.b16 %v647
    %v656 = vpack.c.b16 %v653, %v652
    %v657 = vpack.c.b16 %v655, %v654
    %660 = vmatprep.subr.bf16.mxu0 0
    %661 = vmatpush1.bf16.msra.mxu0 0
    %662 = vmatprep.subr.bf16.mxu0 0
    %663 = vmatpush1.bf16.msra.mxu0 0
    %664 = vmatprep.subr.bf16.mxu0 0
    %665 = vmatpush1.bf16.msra.mxu0 0
    %666 = vmatprep.subr.bf16.mxu0 0
    %667 = vmatpush1.bf16.msra.mxu0 0
    %668 = vmatprep.subr.bf16.mxu0 0
    %669 = vmatpush1.bf16.msra.mxu0 0
    %670 = vmatprep.subr.bf16.mxu0 0
    %671 = vmatpush1.bf16.msra.mxu0 0
    %672 = vmatprep.subr.bf16.mxu0 0
    %673 = vmatpush1.bf16.msra.mxu0 %v657
    %674 = vmatprep.subr.bf16.mxu0 0
    %675 = vmatpush1.bf16.msra.mxu0 %v656
    %676 = vmatprep.subr.bf16.mxu0 0
    %677 = vmatpush2.bf16.msra.mxu0 0
    %678 = vmatprep.subr.bf16.mxu0 0
    %679 = vmatpush2.bf16.msra.mxu0 0
    %680 = vmatprep.subr.bf16.mxu0 0
    %681 = vmatpush2.bf16.msra.mxu0 0
    %682 = vmatprep.subr.bf16.mxu0 0
    %683 = vmatpush2.bf16.msra.mxu0 0
    %684 = vmatprep.subr.bf16.mxu0 0
    %685 = vmatpush2.bf16.msra.mxu0 0
    %686 = vmatprep.subr.bf16.mxu0 0
    %687 = vmatpush2.bf16.msra.mxu0 0
    %688 = vmatprep.subr.bf16.mxu0 0
    %689 = vmatpush2.bf16.msra.mxu0 0
    %690 = vmatprep.subr.bf16.mxu0 0
    %691 = vmatpush2.bf16.msra.mxu0 0
    %692 = vmatprep.mubr.bf16.mxu0 0
    %693 = vmatmul.mubr.bf16.gmra.mxu0 %v86
    %v694 = vpop.f32.mrf.mxu0
    %v695 = vadd.f32 0.0, %v694
    %v696 = vpop.f32.mrf.mxu0
    %v697 = vpop.f32.mrf.mxu0
    %v698 = vadd.f32 0.0, %v697
    %v699 = vpop.f32.mrf.mxu0
    %700 = vmatprep.mubr.bf16.mxu0 0
    %701 = vmatmul.mubr.bf16.gmra.mxu0 %v89
    %v702 = vpop.f32.mrf.mxu0
    %v703 = vadd.f32 0.0, %v702
    %v704 = vpop.f32.mrf.mxu0
    %v705 = vpop.f32.mrf.mxu0
    %v706 = vadd.f32 0.0, %v705
    %v707 = vpop.f32.mrf.mxu0
    %708 = vdwg.mxu0
    %v709 = vpack.c.bf16 %v566, %v563
    %v710 = vpack.c.bf16 %v574, %v571
    %v711 = vpack.c.bf16 %v632, %v629
    %v712 = vpack.c.bf16 %v640, %v637
    %v713 = vpack.c.bf16 %v698, %v695
    %v714 = vpack.c.bf16 %v706, %v703
    %v716 = vsel %vm278, %v709, 0
    %v719 = vsel %vm278, %v711, 0
    %721 = vmatprep.subr.bf16.mxu0 0
    %722 = vmatpush1.bf16.xpose.msra.mxu0 0
    %723 = vmatprep.subr.bf16.mxu0 0
    %724 = vmatpush1.bf16.xpose.msra.mxu0 0
    %725 = vmatprep.subr.bf16.mxu0 0
    %726 = vmatpush1.bf16.xpose.msra.mxu0 0
    %727 = vmatprep.subr.bf16.mxu0 0
    %728 = vmatpush1.bf16.xpose.msra.mxu0 0
    %729 = vmatprep.subr.bf16.mxu0 0
    %730 = vmatpush1.bf16.xpose.msra.mxu0 0
    %731 = vmatprep.subr.bf16.mxu0 0
    %732 = vmatpush1.bf16.xpose.msra.mxu0 0
    %733 = vmatprep.subr.bf16.mxu0 0
    %734 = vmatpush1.bf16.xpose.msra.mxu0 0
    %735 = vmatprep.subr.bf16.mxu0 0
    %736 = vmatpush1.bf16.xpose.msra.mxu0 %v719
    %737 = vmatprep.subr.bf16.mxu0 0
    %738 = vmatpush2.bf16.xpose.msra.mxu0 0
    %739 = vmatprep.subr.bf16.mxu0 0
    %740 = vmatpush2.bf16.xpose.msra.mxu0 0
    %741 = vmatprep.subr.bf16.mxu0 0
    %742 = vmatpush2.bf16.xpose.msra.mxu0 0
    %743 = vmatprep.subr.bf16.mxu0 0
    %744 = vmatpush2.bf16.xpose.msra.mxu0 0
    %745 = vmatprep.subr.bf16.mxu0 0
    %746 = vmatpush2.bf16.xpose.msra.mxu0 0
    %747 = vmatprep.subr.bf16.mxu0 0
    %748 = vmatpush2.bf16.xpose.msra.mxu0 0
    %749 = vmatprep.subr.bf16.mxu0 0
    %750 = vmatpush2.bf16.xpose.msra.mxu0 0
    %751 = vmatprep.subr.bf16.mxu0 0
    %752 = vmatpush2.bf16.xpose.msra.mxu0 0
    %753 = vmatprep.mubr.bf16.mxu0 0
    %754 = vmatmul.mubr.bf16.gmra.mxu0 %v716
    %v755 = vpop.f32.mrf.mxu0
    %v756 = vadd.f32 0.0, %v755
    %v757 = vpop.f32.mrf.mxu0
    %v758 = vpop.f32.mrf.mxu0
    %v759 = vadd.f32 0.0, %v758
    %v760 = vpop.f32.mrf.mxu0
    %761 = vdwg.mxu0
    %v763 = vsel %vm278, %v710, 0
    %v766 = vsel %vm278, %v712, 0
    %768 = vmatprep.subr.bf16.mxu0 0
    %769 = vmatpush1.bf16.xpose.msra.mxu0 0
    %770 = vmatprep.subr.bf16.mxu0 0
    %771 = vmatpush1.bf16.xpose.msra.mxu0 0
    %772 = vmatprep.subr.bf16.mxu0 0
    %773 = vmatpush1.bf16.xpose.msra.mxu0 0
    %774 = vmatprep.subr.bf16.mxu0 0
    %775 = vmatpush1.bf16.xpose.msra.mxu0 0
    %776 = vmatprep.subr.bf16.mxu0 0
    %777 = vmatpush1.bf16.xpose.msra.mxu0 0
    %778 = vmatprep.subr.bf16.mxu0 0
    %779 = vmatpush1.bf16.xpose.msra.mxu0 0
    %780 = vmatprep.subr.bf16.mxu0 0
    %781 = vmatpush1.bf16.xpose.msra.mxu0 0
    %782 = vmatprep.subr.bf16.mxu0 0
    %783 = vmatpush1.bf16.xpose.msra.mxu0 %v766
    %784 = vmatprep.subr.bf16.mxu0 0
    %785 = vmatpush2.bf16.xpose.msra.mxu0 0
    %786 = vmatprep.subr.bf16.mxu0 0
    %787 = vmatpush2.bf16.xpose.msra.mxu0 0
    %788 = vmatprep.subr.bf16.mxu0 0
    %789 = vmatpush2.bf16.xpose.msra.mxu0 0
    %790 = vmatprep.subr.bf16.mxu0 0
    %791 = vmatpush2.bf16.xpose.msra.mxu0 0
    %792 = vmatprep.subr.bf16.mxu0 0
    %793 = vmatpush2.bf16.xpose.msra.mxu0 0
    %794 = vmatprep.subr.bf16.mxu0 0
    %795 = vmatpush2.bf16.xpose.msra.mxu0 0
    %796 = vmatprep.subr.bf16.mxu0 0
    %797 = vmatpush2.bf16.xpose.msra.mxu0 0
    %798 = vmatprep.subr.bf16.mxu0 0
    %799 = vmatpush2.bf16.xpose.msra.mxu0 0
    %800 = vmatprep.mubr.bf16.mxu0 0
    %801 = vmatmul.mubr.bf16.gmra.mxu0 %v763
    %v802 = vpop.f32.mrf.mxu0
    %v803 = vadd.f32 0.0, %v802
    %v804 = vpop.f32.mrf.mxu0
    %v805 = vpop.f32.mrf.mxu0
    %v806 = vadd.f32 0.0, %v805
    %v807 = vpop.f32.mrf.mxu0
    %808 = vdwg.mxu0
    %v809 = vsel %vm373, %v756, -inf
    %810 = vmax.xlane.f32.xlu0 %v809
    %v811 = vpop.xlane.xlu0 %810
    %v812 = vsel %vm373, %v759, -inf
    %813 = vmax.xlane.f32.xlu0 %v812
    %v814 = vpop.xlane.xlu0 %813
    %v815 = vsel %vm373, %v803, -inf
    %816 = vmax.xlane.f32.xlu0 %v815
    %v817 = vpop.xlane.xlu0 %816
    %v818 = vsel %vm373, %v806, -inf
    %819 = vmax.xlane.f32.xlu0 %v818
    %v820 = vpop.xlane.xlu0 %819
    %v821 = vsub.f32 %v756, %v811
    %v822 = vsub.f32 %v759, %v814
    %v823 = vsub.f32 %v803, %v817
    %v824 = vsub.f32 %v806, %v820
    %v825 = vmul.f32 %v821, 1.442695
    %v826 = vpow.pop %v825
    %v827 = vmul.f32 %v822, 1.442695
    %v828 = vpow.pop %v827
    %v829 = vmul.f32 %v823, 1.442695
    %v830 = vpow.pop %v829
    %v831 = vmul.f32 %v824, 1.442695
    %v832 = vpow.pop %v831
    %v833 = vsel %vm373, %v826, 0.0
    %834 = vadd.xlane.f32.xlu0 %v833
    %v835 = vpop.xlane.xlu0 %834
    %v836 = vsel %vm373, %v828, 0.0
    %837 = vadd.xlane.f32.xlu0 %v836
    %v838 = vpop.xlane.xlu0 %837
    %v839 = vsel %vm373, %v830, 0.0
    %840 = vadd.xlane.f32.xlu0 %v839
    %v841 = vpop.xlane.xlu0 %840
    %v842 = vsel %vm373, %v832, 0.0
    %843 = vadd.xlane.f32.xlu0 %v842
    %v844 = vpop.xlane.xlu0 %843
    %v845 = vrcp.pop %v835
    %v846 = vrcp.pop %v838
    %v847 = vrcp.pop %v841
    %v848 = vrcp.pop %v844
    %v849 = vmul.f32 %v826, %v845
    %v850 = vmul.f32 %v828, %v846
    %v851 = vmul.f32 %v830, %v847
    %v852 = vmul.f32 %v832, %v848
    %v853 = vpack.c.bf16 %v850, %v849
    %v854 = vpack.c.bf16 %v852, %v851
    %v856 = vsel %vm373, %v853, 0
    %858 = vmatprep.subr.bf16.mxu0 0
    %859 = vmatpush1.bf16.msra.mxu0 0
    %860 = vmatprep.subr.bf16.mxu0 0
    %861 = vmatpush1.bf16.msra.mxu0 0
    %862 = vmatprep.subr.bf16.mxu0 0
    %863 = vmatpush1.bf16.msra.mxu0 0
    %864 = vmatprep.subr.bf16.mxu0 0
    %865 = vmatpush1.bf16.msra.mxu0 0
    %866 = vmatprep.subr.bf16.mxu0 0
    %867 = vmatpush1.bf16.msra.mxu0 0
    %868 = vmatprep.subr.bf16.mxu0 0
    %869 = vmatpush1.bf16.msra.mxu0 0
    %870 = vmatprep.subr.bf16.mxu0 0
    %871 = vmatpush1.bf16.msra.mxu0 0
    %872 = vmatprep.subr.bf16.mxu0 0
    %873 = vmatpush1.bf16.msra.mxu0 %v713
    %874 = vmatprep.subr.bf16.mxu0 0
    %875 = vmatpush2.bf16.msra.mxu0 0
    %876 = vmatprep.subr.bf16.mxu0 0
    %877 = vmatpush2.bf16.msra.mxu0 0
    %878 = vmatprep.subr.bf16.mxu0 0
    %879 = vmatpush2.bf16.msra.mxu0 0
    %880 = vmatprep.subr.bf16.mxu0 0
    %881 = vmatpush2.bf16.msra.mxu0 0
    %882 = vmatprep.subr.bf16.mxu0 0
    %883 = vmatpush2.bf16.msra.mxu0 0
    %884 = vmatprep.subr.bf16.mxu0 0
    %885 = vmatpush2.bf16.msra.mxu0 0
    %886 = vmatprep.subr.bf16.mxu0 0
    %887 = vmatpush2.bf16.msra.mxu0 0
    %888 = vmatprep.subr.bf16.mxu0 0
    %889 = vmatpush2.bf16.msra.mxu0 0
    %890 = vmatprep.mubr.bf16.mxu0 0
    %891 = vmatmul.mubr.bf16.gmra.mxu0 %v856
    %v892 = vpop.f32.mrf.mxu0
    %v893 = vadd.f32 0.0, %v892
    %v894 = vpop.f32.mrf.mxu0
    %v895 = vpop.f32.mrf.mxu0
    %v896 = vadd.f32 0.0, %v895
    %v897 = vpop.f32.mrf.mxu0
    %898 = vdwg.mxu0
    %v900 = vsel %vm373, %v854, 0
    %902 = vmatprep.subr.bf16.mxu0 0
    %903 = vmatpush1.bf16.msra.mxu0 0
    %904 = vmatprep.subr.bf16.mxu0 0
    %905 = vmatpush1.bf16.msra.mxu0 0
    %906 = vmatprep.subr.bf16.mxu0 0
    %907 = vmatpush1.bf16.msra.mxu0 0
    %908 = vmatprep.subr.bf16.mxu0 0
    %909 = vmatpush1.bf16.msra.mxu0 0
    %910 = vmatprep.subr.bf16.mxu0 0
    %911 = vmatpush1.bf16.msra.mxu0 0
    %912 = vmatprep.subr.bf16.mxu0 0
    %913 = vmatpush1.bf16.msra.mxu0 0
    %914 = vmatprep.subr.bf16.mxu0 0
    %915 = vmatpush1.bf16.msra.mxu0 0
    %916 = vmatprep.subr.bf16.mxu0 0
    %917 = vmatpush1.bf16.msra.mxu0 %v714
    %918 = vmatprep.subr.bf16.mxu0 0
    %919 = vmatpush2.bf16.msra.mxu0 0
    %920 = vmatprep.subr.bf16.mxu0 0
    %921 = vmatpush2.bf16.msra.mxu0 0
    %922 = vmatprep.subr.bf16.mxu0 0
    %923 = vmatpush2.bf16.msra.mxu0 0
    %924 = vmatprep.subr.bf16.mxu0 0
    %925 = vmatpush2.bf16.msra.mxu0 0
    %926 = vmatprep.subr.bf16.mxu0 0
    %927 = vmatpush2.bf16.msra.mxu0 0
    %928 = vmatprep.subr.bf16.mxu0 0
    %929 = vmatpush2.bf16.msra.mxu0 0
    %930 = vmatprep.subr.bf16.mxu0 0
    %931 = vmatpush2.bf16.msra.mxu0 0
    %932 = vmatprep.subr.bf16.mxu0 0
    %933 = vmatpush2.bf16.msra.mxu0 0
    %934 = vmatprep.mubr.bf16.mxu0 0
    %935 = vmatmul.mubr.bf16.gmra.mxu0 %v900
    %v936 = vpop.f32.mrf.mxu0
    %v937 = vadd.f32 0.0, %v936
    %v938 = vpop.f32.mrf.mxu0
    %v939 = vpop.f32.mrf.mxu0
    %v940 = vadd.f32 0.0, %v939
    %v941 = vpop.f32.mrf.mxu0
    %942 = vdwg.mxu0
    %v943 = vpack.c.bf16 %v896, %v893
    %v944 = vpack.c.bf16 %v940, %v937
    %s945 = scalar_lea.vmem %s3, 4
    %v946 = vld [vmem:[%s945] sm:$0xf]
    %v948 = vsel %vm278, %v943, 0
    %v951 = vsel %vm278, %v944, 0
    %vm953 = vcmask 1043456
    %v955 = vsel %vm953, %v946, 0
    %957 = vmatprep.subr.bf16.mxu0 0
    %958 = vmatpush1.bf16.msra.mxu0 0
    %959 = vmatprep.subr.bf16.mxu0 0
    %960 = vmatpush1.bf16.msra.mxu0 0
    %961 = vmatprep.subr.bf16.mxu0 0
    %962 = vmatpush1.bf16.msra.mxu0 0
    %963 = vmatprep.subr.bf16.mxu0 0
    %964 = vmatpush1.bf16.msra.mxu0 0
    %965 = vmatprep.subr.bf16.mxu0 0
    %966 = vmatpush1.bf16.msra.mxu0 0
    %967 = vmatprep.subr.bf16.mxu0 0
    %968 = vmatpush1.bf16.msra.mxu0 0
    %969 = vmatprep.subr.bf16.mxu0 0
    %970 = vmatpush1.bf16.msra.mxu0 0
    %971 = vmatprep.subr.bf16.mxu0 0
    %972 = vmatpush1.bf16.msra.mxu0 %v955
    %973 = vmatprep.subr.bf16.mxu0 0
    %974 = vmatpush2.bf16.msra.mxu0 0
    %975 = vmatprep.subr.bf16.mxu0 0
    %976 = vmatpush2.bf16.msra.mxu0 0
    %977 = vmatprep.subr.bf16.mxu0 0
    %978 = vmatpush2.bf16.msra.mxu0 0
    %979 = vmatprep.subr.bf16.mxu0 0
    %980 = vmatpush2.bf16.msra.mxu0 0
    %981 = vmatprep.subr.bf16.mxu0 0
    %982 = vmatpush2.bf16.msra.mxu0 0
    %983 = vmatprep.subr.bf16.mxu0 0
    %984 = vmatpush2.bf16.msra.mxu0 0
    %985 = vmatprep.subr.bf16.mxu0 0
    %986 = vmatpush2.bf16.msra.mxu0 0
    %987 = vmatprep.subr.bf16.mxu0 0
    %988 = vmatpush2.bf16.msra.mxu0 0
    %989 = vmatprep.mubr.bf16.mxu0 0
    %990 = vmatmul.mubr.bf16.gmra.mxu0 %v948
    %v991 = vpop.f32.mrf.mxu0
    %v992 = vadd.f32 0.0, %v991
    %v993 = vpop.f32.mrf.mxu0
    %v994 = vpop.f32.mrf.mxu0
    %v995 = vadd.f32 0.0, %v994
    %v996 = vpop.f32.mrf.mxu0
    %997 = vmatprep.mubr.bf16.mxu0 0
    %998 = vmatmul.mubr.bf16.gmra.mxu0 %v951
    %v999 = vpop.f32.mrf.mxu0
    %v1000 = vadd.f32 0.0, %v999
    %v1001 = vpop.f32.mrf.mxu0
    %v1002 = vpop.f32.mrf.mxu0
    %v1003 = vadd.f32 0.0, %v1002
    %v1004 = vpop.f32.mrf.mxu0
    %1005 = vdwg.mxu0
    %v1007 = vsel %vm278, %v508, 0
    %v1010 = vsel %vm278, %v509, 0
    %v1013 = vsel %vm953, %v510, 0
    %1015 = vmatprep.subr.bf16.mxu0 0
    %1016 = vmatpush1.bf16.msra.mxu0 0
    %1017 = vmatprep.subr.bf16.mxu0 0
    %1018 = vmatpush1.bf16.msra.mxu0 0
    %1019 = vmatprep.subr.bf16.mxu0 0
    %1020 = vmatpush1.bf16.msra.mxu0 0
    %1021 = vmatprep.subr.bf16.mxu0 0
    %1022 = vmatpush1.bf16.msra.mxu0 0
    %1023 = vmatprep.subr.bf16.mxu0 0
    %1024 = vmatpush1.bf16.msra.mxu0 0
    %1025 = vmatprep.subr.bf16.mxu0 0
    %1026 = vmatpush1.bf16.msra.mxu0 0
    %1027 = vmatprep.subr.bf16.mxu0 0
    %1028 = vmatpush1.bf16.msra.mxu0 0
    %1029 = vmatprep.subr.bf16.mxu0 0
    %1030 = vmatpush1.bf16.msra.mxu0 %v1013
    %1031 = vmatprep.subr.bf16.mxu0 0
    %1032 = vmatpush2.bf16.msra.mxu0 0
    %1033 = vmatprep.subr.bf16.mxu0 0
    %1034 = vmatpush2.bf16.msra.mxu0 0
    %1035 = vmatprep.subr.bf16.mxu0 0
    %1036 = vmatpush2.bf16.msra.mxu0 0
    %1037 = vmatprep.subr.bf16.mxu0 0
    %1038 = vmatpush2.bf16.msra.mxu0 0
    %1039 = vmatprep.subr.bf16.mxu0 0
    %1040 = vmatpush2.bf16.msra.mxu0 0
    %1041 = vmatprep.subr.bf16.mxu0 0
    %1042 = vmatpush2.bf16.msra.mxu0 0
    %1043 = vmatprep.subr.bf16.mxu0 0
    %1044 = vmatpush2.bf16.msra.mxu0 0
    %1045 = vmatprep.subr.bf16.mxu0 0
    %1046 = vmatpush2.bf16.msra.mxu0 0
    %1047 = vmatprep.mubr.bf16.mxu0 0
    %1048 = vmatmul.mubr.bf16.gmra.mxu0 %v1007
    %v1049 = vpop.f32.mrf.mxu0
    %v1050 = vadd.f32 %v992, %v1049
    %v1051 = vpop.f32.mrf.mxu0
    %v1052 = vpop.f32.mrf.mxu0
    %v1053 = vadd.f32 %v995, %v1052
    %v1054 = vpop.f32.mrf.mxu0
    %1055 = vmatprep.mubr.bf16.mxu0 0
    %1056 = vmatmul.mubr.bf16.gmra.mxu0 %v1010
    %v1057 = vpop.f32.mrf.mxu0
    %v1058 = vadd.f32 %v1000, %v1057
    %v1059 = vpop.f32.mrf.mxu0
    %v1060 = vpop.f32.mrf.mxu0
    %v1061 = vadd.f32 %v1003, %v1060
    %v1062 = vpop.f32.mrf.mxu0
    %1063 = vdwg.mxu0
    %s1064 = scalar_lea.vmem %s2, 32
    %v1065 = vld [vmem:[%s1064] sm:$0xf]
    %v1066 = vld [vmem:[%s1064 + $0x4] sm:$0xf]
    %v1067 = vld [vmem:[%s1064 + $0x8] sm:$0xf]
    %v1068 = vld [vmem:[%s1064 + $0xc] sm:$0xf]
    %v1073 = vunpack.c.l.b16 %v1065
    %v1074 = vunpack.c.l.b16 %v1066
    %v1075 = vunpack.c.l.b16 %v1067
    %v1076 = vunpack.c.l.b16 %v1068
    %v1077 = vpack.c.b16 %v1074, %v1073
    %v1078 = vpack.c.b16 %v1076, %v1075
    %1081 = vmatprep.subr.bf16.mxu0 0
    %1082 = vmatpush1.bf16.msra.mxu0 0
    %1083 = vmatprep.subr.bf16.mxu0 0
    %1084 = vmatpush1.bf16.msra.mxu0 0
    %1085 = vmatprep.subr.bf16.mxu0 0
    %1086 = vmatpush1.bf16.msra.mxu0 0
    %1087 = vmatprep.subr.bf16.mxu0 0
    %1088 = vmatpush1.bf16.msra.mxu0 0
    %1089 = vmatprep.subr.bf16.mxu0 0
    %1090 = vmatpush1.bf16.msra.mxu0 0
    %1091 = vmatprep.subr.bf16.mxu0 0
    %1092 = vmatpush1.bf16.msra.mxu0 0
    %1093 = vmatprep.subr.bf16.mxu0 0
    %1094 = vmatpush1.bf16.msra.mxu0 %v1078
    %1095 = vmatprep.subr.bf16.mxu0 0
    %1096 = vmatpush1.bf16.msra.mxu0 %v1077
    %1097 = vmatprep.subr.bf16.mxu0 0
    %1098 = vmatpush2.bf16.msra.mxu0 0
    %1099 = vmatprep.subr.bf16.mxu0 0
    %1100 = vmatpush2.bf16.msra.mxu0 0
    %1101 = vmatprep.subr.bf16.mxu0 0
    %1102 = vmatpush2.bf16.msra.mxu0 0
    %1103 = vmatprep.subr.bf16.mxu0 0
    %1104 = vmatpush2.bf16.msra.mxu0 0
    %1105 = vmatprep.subr.bf16.mxu0 0
    %1106 = vmatpush2.bf16.msra.mxu0 0
    %1107 = vmatprep.subr.bf16.mxu0 0
    %1108 = vmatpush2.bf16.msra.mxu0 0
    %1109 = vmatprep.subr.bf16.mxu0 0
    %1110 = vmatpush2.bf16.msra.mxu0 0
    %1111 = vmatprep.subr.bf16.mxu0 0
    %1112 = vmatpush2.bf16.msra.mxu0 0
    %1113 = vmatprep.mubr.bf16.mxu0 0
    %1114 = vmatmul.mubr.bf16.gmra.mxu0 %v86
    %v1115 = vpop.f32.mrf.mxu0
    %v1116 = vadd.f32 0.0, %v1115
    %v1117 = vpop.f32.mrf.mxu0
    %v1118 = vpop.f32.mrf.mxu0
    %v1119 = vadd.f32 0.0, %v1118
    %v1120 = vpop.f32.mrf.mxu0
    %1121 = vmatprep.mubr.bf16.mxu0 0
    %1122 = vmatmul.mubr.bf16.gmra.mxu0 %v89
    %v1123 = vpop.f32.mrf.mxu0
    %v1124 = vadd.f32 0.0, %v1123
    %v1125 = vpop.f32.mrf.mxu0
    %v1126 = vpop.f32.mrf.mxu0
    %v1127 = vadd.f32 0.0, %v1126
    %v1128 = vpop.f32.mrf.mxu0
    %1129 = vdwg.mxu0
    %s1130 = scalar_lea.vmem %s2, 96
    %v1131 = vld [vmem:[%s1130] sm:$0xf]
    %v1132 = vld [vmem:[%s1130 + $0x4] sm:$0xf]
    %v1133 = vld [vmem:[%s1130 + $0x8] sm:$0xf]
    %v1134 = vld [vmem:[%s1130 + $0xc] sm:$0xf]
    %v1139 = vunpack.c.l.b16 %v1131
    %v1140 = vunpack.c.l.b16 %v1132
    %v1141 = vunpack.c.l.b16 %v1133
    %v1142 = vunpack.c.l.b16 %v1134
    %v1143 = vpack.c.b16 %v1140, %v1139
    %v1144 = vpack.c.b16 %v1142, %v1141
    %1147 = vmatprep.subr.bf16.mxu0 0
    %1148 = vmatpush1.bf16.msra.mxu0 0
    %1149 = vmatprep.subr.bf16.mxu0 0
    %1150 = vmatpush1.bf16.msra.mxu0 0
    %1151 = vmatprep.subr.bf16.mxu0 0
    %1152 = vmatpush1.bf16.msra.mxu0 0
    %1153 = vmatprep.subr.bf16.mxu0 0
    %1154 = vmatpush1.bf16.msra.mxu0 0
    %1155 = vmatprep.subr.bf16.mxu0 0
    %1156 = vmatpush1.bf16.msra.mxu0 0
    %1157 = vmatprep.subr.bf16.mxu0 0
    %1158 = vmatpush1.bf16.msra.mxu0 0
    %1159 = vmatprep.subr.bf16.mxu0 0
    %1160 = vmatpush1.bf16.msra.mxu0 %v1144
    %1161 = vmatprep.subr.bf16.mxu0 0
    %1162 = vmatpush1.bf16.msra.mxu0 %v1143
    %1163 = vmatprep.subr.bf16.mxu0 0
    %1164 = vmatpush2.bf16.msra.mxu0 0
    %1165 = vmatprep.subr.bf16.mxu0 0
    %1166 = vmatpush2.bf16.msra.mxu0 0
    %1167 = vmatprep.subr.bf16.mxu0 0
    %1168 = vmatpush2.bf16.msra.mxu0 0
    %1169 = vmatprep.subr.bf16.mxu0 0
    %1170 = vmatpush2.bf16.msra.mxu0 0
    %1171 = vmatprep.subr.bf16.mxu0 0
    %1172 = vmatpush2.bf16.msra.mxu0 0
    %1173 = vmatprep.subr.bf16.mxu0 0
    %1174 = vmatpush2.bf16.msra.mxu0 0
    %1175 = vmatprep.subr.bf16.mxu0 0
    %1176 = vmatpush2.bf16.msra.mxu0 0
    %1177 = vmatprep.subr.bf16.mxu0 0
    %1178 = vmatpush2.bf16.msra.mxu0 0
    %1179 = vmatprep.mubr.bf16.mxu0 0
    %1180 = vmatmul.mubr.bf16.gmra.mxu0 %v86
    %v1181 = vpop.f32.mrf.mxu0
    %v1182 = vadd.f32 0.0, %v1181
    %v1183 = vpop.f32.mrf.mxu0
    %v1184 = vpop.f32.mrf.mxu0
    %v1185 = vadd.f32 0.0, %v1184
    %v1186 = vpop.f32.mrf.mxu0
    %1187 = vmatprep.mubr.bf16.mxu0 0
    %1188 = vmatmul.mubr.bf16.gmra.mxu0 %v89
    %v1189 = vpop.f32.mrf.mxu0
    %v1190 = vadd.f32 0.0, %v1189
    %v1191 = vpop.f32.mrf.mxu0
    %v1192 = vpop.f32.mrf.mxu0
    %v1193 = vadd.f32 0.0, %v1192
    %v1194 = vpop.f32.mrf.mxu0
    %1195 = vdwg.mxu0
    %s1196 = scalar_lea.vmem %s2, 160
    %v1197 = vld [vmem:[%s1196] sm:$0xf]
    %v1198 = vld [vmem:[%s1196 + $0x4] sm:$0xf]
    %v1199 = vld [vmem:[%s1196 + $0x8] sm:$0xf]
    %v1200 = vld [vmem:[%s1196 + $0xc] sm:$0xf]
    %v1205 = vunpack.c.l.b16 %v1197
    %v1206 = vunpack.c.l.b16 %v1198
    %v1207 = vunpack.c.l.b16 %v1199
    %v1208 = vunpack.c.l.b16 %v1200
    %v1209 = vpack.c.b16 %v1206, %v1205
    %v1210 = vpack.c.b16 %v1208, %v1207
    %1213 = vmatprep.subr.bf16.mxu0 0
    %1214 = vmatpush1.bf16.msra.mxu0 0
    %1215 = vmatprep.subr.bf16.mxu0 0
    %1216 = vmatpush1.bf16.msra.mxu0 0
    %1217 = vmatprep.subr.bf16.mxu0 0
    %1218 = vmatpush1.bf16.msra.mxu0 0
    %1219 = vmatprep.subr.bf16.mxu0 0
    %1220 = vmatpush1.bf16.msra.mxu0 0
    %1221 = vmatprep.subr.bf16.mxu0 0
    %1222 = vmatpush1.bf16.msra.mxu0 0
    %1223 = vmatprep.subr.bf16.mxu0 0
    %1224 = vmatpush1.bf16.msra.mxu0 0
    %1225 = vmatprep.subr.bf16.mxu0 0
    %1226 = vmatpush1.bf16.msra.mxu0 %v1210
    %1227 = vmatprep.subr.bf16.mxu0 0
    %1228 = vmatpush1.bf16.msra.mxu0 %v1209
    %1229 = vmatprep.subr.bf16.mxu0 0
    %1230 = vmatpush2.bf16.msra.mxu0 0
    %1231 = vmatprep.subr.bf16.mxu0 0
    %1232 = vmatpush2.bf16.msra.mxu0 0
    %1233 = vmatprep.subr.bf16.mxu0 0
    %1234 = vmatpush2.bf16.msra.mxu0 0
    %1235 = vmatprep.subr.bf16.mxu0 0
    %1236 = vmatpush2.bf16.msra.mxu0 0
    %1237 = vmatprep.subr.bf16.mxu0 0
    %1238 = vmatpush2.bf16.msra.mxu0 0
    %1239 = vmatprep.subr.bf16.mxu0 0
    %1240 = vmatpush2.bf16.msra.mxu0 0
    %1241 = vmatprep.subr.bf16.mxu0 0
    %1242 = vmatpush2.bf16.msra.mxu0 0
    %1243 = vmatprep.subr.bf16.mxu0 0
    %1244 = vmatpush2.bf16.msra.mxu0 0
    %1245 = vmatprep.mubr.bf16.mxu0 0
    %1246 = vmatmul.mubr.bf16.gmra.mxu0 %v86
    %v1247 = vpop.f32.mrf.mxu0
    %v1248 = vadd.f32 0.0, %v1247
    %v1249 = vpop.f32.mrf.mxu0
    %v1250 = vpop.f32.mrf.mxu0
    %v1251 = vadd.f32 0.0, %v1250
    %v1252 = vpop.f32.mrf.mxu0
    %1253 = vmatprep.mubr.bf16.mxu0 0
    %1254 = vmatmul.mubr.bf16.gmra.mxu0 %v89
    %v1255 = vpop.f32.mrf.mxu0
    %v1256 = vadd.f32 0.0, %v1255
    %v1257 = vpop.f32.mrf.mxu0
    %v1258 = vpop.f32.mrf.mxu0
    %v1259 = vadd.f32 0.0, %v1258
    %v1260 = vpop.f32.mrf.mxu0
    %1261 = vdwg.mxu0
    %v1262 = vpack.c.bf16 %v1119, %v1116
    %v1263 = vpack.c.bf16 %v1127, %v1124
    %v1264 = vpack.c.bf16 %v1185, %v1182
    %v1265 = vpack.c.bf16 %v1193, %v1190
    %v1266 = vpack.c.bf16 %v1251, %v1248
    %v1267 = vpack.c.bf16 %v1259, %v1256
    %v1269 = vsel %vm278, %v1262, 0
    %v1272 = vsel %vm278, %v1264, 0
    %1274 = vmatprep.subr.bf16.mxu0 0
    %1275 = vmatpush1.bf16.xpose.msra.mxu0 0
    %1276 = vmatprep.subr.bf16.mxu0 0
    %1277 = vmatpush1.bf16.xpose.msra.mxu0 0
    %1278 = vmatprep.subr.bf16.mxu0 0
    %1279 = vmatpush1.bf16.xpose.msra.mxu0 0
    %1280 = vmatprep.subr.bf16.mxu0 0
    %1281 = vmatpush1.bf16.xpose.msra.mxu0 0
    %1282 = vmatprep.subr.bf16.mxu0 0
    %1283 = vmatpush1.bf16.xpose.msra.mxu0 0
    %1284 = vmatprep.subr.bf16.mxu0 0
    %1285 = vmatpush1.bf16.xpose.msra.mxu0 0
    %1286 = vmatprep.subr.bf16.mxu0 0
    %1287 = vmatpush1.bf16.xpose.msra.mxu0 0
    %1288 = vmatprep.subr.bf16.mxu0 0
    %1289 = vmatpush1.bf16.xpose.msra.mxu0 %v1272
    %1290 = vmatprep.subr.bf16.mxu0 0
    %1291 = vmatpush2.bf16.xpose.msra.mxu0 0
    %1292 = vmatprep.subr.bf16.mxu0 0
    %1293 = vmatpush2.bf16.xpose.msra.mxu0 0
    %1294 = vmatprep.subr.bf16.mxu0 0
    %1295 = vmatpush2.bf16.xpose.msra.mxu0 0
    %1296 = vmatprep.subr.bf16.mxu0 0
    %1297 = vmatpush2.bf16.xpose.msra.mxu0 0
    %1298 = vmatprep.subr.bf16.mxu0 0
    %1299 = vmatpush2.bf16.xpose.msra.mxu0 0
    %1300 = vmatprep.subr.bf16.mxu0 0
    %1301 = vmatpush2.bf16.xpose.msra.mxu0 0
    %1302 = vmatprep.subr.bf16.mxu0 0
    %1303 = vmatpush2.bf16.xpose.msra.mxu0 0
    %1304 = vmatprep.subr.bf16.mxu0 0
    %1305 = vmatpush2.bf16.xpose.msra.mxu0 0
    %1306 = vmatprep.mubr.bf16.mxu0 0
    %1307 = vmatmul.mubr.bf16.gmra.mxu0 %v1269
    %v1308 = vpop.f32.mrf.mxu0
    %v1309 = vadd.f32 0.0, %v1308
    %v1310 = vpop.f32.mrf.mxu0
    %v1311 = vpop.f32.mrf.mxu0
    %v1312 = vadd.f32 0.0, %v1311
    %v1313 = vpop.f32.mrf.mxu0
    %1314 = vdwg.mxu0
    %v1316 = vsel %vm278, %v1263, 0
    %v1319 = vsel %vm278, %v1265, 0
    %1321 = vmatprep.subr.bf16.mxu0 0
    %1322 = vmatpush1.bf16.xpose.msra.mxu0 0
    %1323 = vmatprep.subr.bf16.mxu0 0
    %1324 = vmatpush1.bf16.xpose.msra.mxu0 0
    %1325 = vmatprep.subr.bf16.mxu0 0
    %1326 = vmatpush1.bf16.xpose.msra.mxu0 0
    %1327 = vmatprep.subr.bf16.mxu0 0
    %1328 = vmatpush1.bf16.xpose.msra.mxu0 0
    %1329 = vmatprep.subr.bf16.mxu0 0
    %1330 = vmatpush1.bf16.xpose.msra.mxu0 0
    %1331 = vmatprep.subr.bf16.mxu0 0
    %1332 = vmatpush1.bf16.xpose.msra.mxu0 0
    %1333 = vmatprep.subr.bf16.mxu0 0
    %1334 = vmatpush1.bf16.xpose.msra.mxu0 0
    %1335 = vmatprep.subr.bf16.mxu0 0
    %1336 = vmatpush1.bf16.xpose.msra.mxu0 %v1319
    %1337 = vmatprep.subr.bf16.mxu0 0
    %1338 = vmatpush2.bf16.xpose.msra.mxu0 0
    %1339 = vmatprep.subr.bf16.mxu0 0
    %1340 = vmatpush2.bf16.xpose.msra.mxu0 0
    %1341 = vmatprep.subr.bf16.mxu0 0
    %1342 = vmatpush2.bf16.xpose.msra.mxu0 0
    %1343 = vmatprep.subr.bf16.mxu0 0
    %1344 = vmatpush2.bf16.xpose.msra.mxu0 0
    %1345 = vmatprep.subr.bf16.mxu0 0
    %1346 = vmatpush2.bf16.xpose.msra.mxu0 0
    %1347 = vmatprep.subr.bf16.mxu0 0
    %1348 = vmatpush2.bf16.xpose.msra.mxu0 0
    %1349 = vmatprep.subr.bf16.mxu0 0
    %1350 = vmatpush2.bf16.xpose.msra.mxu0 0
    %1351 = vmatprep.subr.bf16.mxu0 0
    %1352 = vmatpush2.bf16.xpose.msra.mxu0 0
    %1353 = vmatprep.mubr.bf16.mxu0 0
    %1354 = vmatmul.mubr.bf16.gmra.mxu0 %v1316
    %v1355 = vpop.f32.mrf.mxu0
    %v1356 = vadd.f32 0.0, %v1355
    %v1357 = vpop.f32.mrf.mxu0
    %v1358 = vpop.f32.mrf.mxu0
    %v1359 = vadd.f32 0.0, %v1358
    %v1360 = vpop.f32.mrf.mxu0
    %1361 = vdwg.mxu0
    %v1362 = vsel %vm373, %v1309, -inf
    %1363 = vmax.xlane.f32.xlu0 %v1362
    %v1364 = vpop.xlane.xlu0 %1363
    %v1365 = vsel %vm373, %v1312, -inf
    %1366 = vmax.xlane.f32.xlu0 %v1365
    %v1367 = vpop.xlane.xlu0 %1366
    %v1368 = vsel %vm373, %v1356, -inf
    %1369 = vmax.xlane.f32.xlu0 %v1368
    %v1370 = vpop.xlane.xlu0 %1369
    %v1371 = vsel %vm373, %v1359, -inf
    %1372 = vmax.xlane.f32.xlu0 %v1371
    %v1373 = vpop.xlane.xlu0 %1372
    %v1374 = vsub.f32 %v1309, %v1364
    %v1375 = vsub.f32 %v1312, %v1367
    %v1376 = vsub.f32 %v1356, %v1370
    %v1377 = vsub.f32 %v1359, %v1373
    %v1378 = vmul.f32 %v1374, 1.442695
    %v1379 = vpow.pop %v1378
    %v1380 = vmul.f32 %v1375, 1.442695
    %v1381 = vpow.pop %v1380
    %v1382 = vmul.f32 %v1376, 1.442695
    %v1383 = vpow.pop %v1382
    %v1384 = vmul.f32 %v1377, 1.442695
    %v1385 = vpow.pop %v1384
    %v1386 = vsel %vm373, %v1379, 0.0
    %1387 = vadd.xlane.f32.xlu0 %v1386
    %v1388 = vpop.xlane.xlu0 %1387
    %v1389 = vsel %vm373, %v1381, 0.0
    %1390 = vadd.xlane.f32.xlu0 %v1389
    %v1391 = vpop.xlane.xlu0 %1390
    %v1392 = vsel %vm373, %v1383, 0.0
    %1393 = vadd.xlane.f32.xlu0 %v1392
    %v1394 = vpop.xlane.xlu0 %1393
    %v1395 = vsel %vm373, %v1385, 0.0
    %1396 = vadd.xlane.f32.xlu0 %v1395
    %v1397 = vpop.xlane.xlu0 %1396
    %v1398 = vrcp.pop %v1388
    %v1399 = vrcp.pop %v1391
    %v1400 = vrcp.pop %v1394
    %v1401 = vrcp.pop %v1397
    %v1402 = vmul.f32 %v1379, %v1398
    %v1403 = vmul.f32 %v1381, %v1399
    %v1404 = vmul.f32 %v1383, %v1400
    %v1405 = vmul.f32 %v1385, %v1401
    %v1406 = vpack.c.bf16 %v1403, %v1402
    %v1407 = vpack.c.bf16 %v1405, %v1404
    %v1409 = vsel %vm373, %v1406, 0
    %1411 = vmatprep.subr.bf16.mxu0 0
    %1412 = vmatpush1.bf16.msra.mxu0 0
    %1413 = vmatprep.subr.bf16.mxu0 0
    %1414 = vmatpush1.bf16.msra.mxu0 0
    %1415 = vmatprep.subr.bf16.mxu0 0
    %1416 = vmatpush1.bf16.msra.mxu0 0
    %1417 = vmatprep.subr.bf16.mxu0 0
    %1418 = vmatpush1.bf16.msra.mxu0 0
    %1419 = vmatprep.subr.bf16.mxu0 0
    %1420 = vmatpush1.bf16.msra.mxu0 0
    %1421 = vmatprep.subr.bf16.mxu0 0
    %1422 = vmatpush1.bf16.msra.mxu0 0
    %1423 = vmatprep.subr.bf16.mxu0 0
    %1424 = vmatpush1.bf16.msra.mxu0 0
    %1425 = vmatprep.subr.bf16.mxu0 0
    %1426 = vmatpush1.bf16.msra.mxu0 %v1266
    %1427 = vmatprep.subr.bf16.mxu0 0
    %1428 = vmatpush2.bf16.msra.mxu0 0
    %1429 = vmatprep.subr.bf16.mxu0 0
    %1430 = vmatpush2.bf16.msra.mxu0 0
    %1431 = vmatprep.subr.bf16.mxu0 0
    %1432 = vmatpush2.bf16.msra.mxu0 0
    %1433 = vmatprep.subr.bf16.mxu0 0
    %1434 = vmatpush2.bf16.msra.mxu0 0
    %1435 = vmatprep.subr.bf16.mxu0 0
    %1436 = vmatpush2.bf16.msra.mxu0 0
    %1437 = vmatprep.subr.bf16.mxu0 0
    %1438 = vmatpush2.bf16.msra.mxu0 0
    %1439 = vmatprep.subr.bf16.mxu0 0
    %1440 = vmatpush2.bf16.msra.mxu0 0
    %1441 = vmatprep.subr.bf16.mxu0 0
    %1442 = vmatpush2.bf16.msra.mxu0 0
    %1443 = vmatprep.mubr.bf16.mxu0 0
    %1444 = vmatmul.mubr.bf16.gmra.mxu0 %v1409
    %v1445 = vpop.f32.mrf.mxu0
    %v1446 = vadd.f32 0.0, %v1445
    %v1447 = vpop.f32.mrf.mxu0
    %v1448 = vpop.f32.mrf.mxu0
    %v1449 = vadd.f32 0.0, %v1448
    %v1450 = vpop.f32.mrf.mxu0
    %1451 = vdwg.mxu0
    %v1453 = vsel %vm373, %v1407, 0
    %1455 = vmatprep.subr.bf16.mxu0 0
    %1456 = vmatpush1.bf16.msra.mxu0 0
    %1457 = vmatprep.subr.bf16.mxu0 0
    %1458 = vmatpush1.bf16.msra.mxu0 0
    %1459 = vmatprep.subr.bf16.mxu0 0
    %1460 = vmatpush1.bf16.msra.mxu0 0
    %1461 = vmatprep.subr.bf16.mxu0 0
    %1462 = vmatpush1.bf16.msra.mxu0 0
    %1463 = vmatprep.subr.bf16.mxu0 0
    %1464 = vmatpush1.bf16.msra.mxu0 0
    %1465 = vmatprep.subr.bf16.mxu0 0
    %1466 = vmatpush1.bf16.msra.mxu0 0
    %1467 = vmatprep.subr.bf16.mxu0 0
    %1468 = vmatpush1.bf16.msra.mxu0 0
    %1469 = vmatprep.subr.bf16.mxu0 0
    %1470 = vmatpush1.bf16.msra.mxu0 %v1267
    %1471 = vmatprep.subr.bf16.mxu0 0
    %1472 = vmatpush2.bf16.msra.mxu0 0
    %1473 = vmatprep.subr.bf16.mxu0 0
    %1474 = vmatpush2.bf16.msra.mxu0 0
    %1475 = vmatprep.subr.bf16.mxu0 0
    %1476 = vmatpush2.bf16.msra.mxu0 0
    %1477 = vmatprep.subr.bf16.mxu0 0
    %1478 = vmatpush2.bf16.msra.mxu0 0
    %1479 = vmatprep.subr.bf16.mxu0 0
    %1480 = vmatpush2.bf16.msra.mxu0 0
    %1481 = vmatprep.subr.bf16.mxu0 0
    %1482 = vmatpush2.bf16.msra.mxu0 0
    %1483 = vmatprep.subr.bf16.mxu0 0
    %1484 = vmatpush2.bf16.msra.mxu0 0
    %1485 = vmatprep.subr.bf16.mxu0 0
    %1486 = vmatpush2.bf16.msra.mxu0 0
    %1487 = vmatprep.mubr.bf16.mxu0 0
    %1488 = vmatmul.mubr.bf16.gmra.mxu0 %v1453
    %v1489 = vpop.f32.mrf.mxu0
    %v1490 = vadd.f32 0.0, %v1489
    %v1491 = vpop.f32.mrf.mxu0
    %v1492 = vpop.f32.mrf.mxu0
    %v1493 = vadd.f32 0.0, %v1492
    %v1494 = vpop.f32.mrf.mxu0
    %1495 = vdwg.mxu0
    %v1496 = vpack.c.bf16 %v1449, %v1446
    %v1497 = vpack.c.bf16 %v1493, %v1490
    %s1498 = scalar_lea.vmem %s3, 8
    %v1499 = vld [vmem:[%s1498] sm:$0xf]
    %v1501 = vsel %vm278, %v1496, 0
    %v1504 = vsel %vm278, %v1497, 0
    %v1507 = vsel %vm953, %v1499, 0
    %1509 = vmatprep.subr.bf16.mxu0 0
    %1510 = vmatpush1.bf16.msra.mxu0 0
    %1511 = vmatprep.subr.bf16.mxu0 0
    %1512 = vmatpush1.bf16.msra.mxu0 0
    %1513 = vmatprep.subr.bf16.mxu0 0
    %1514 = vmatpush1.bf16.msra.mxu0 0
    %1515 = vmatprep.subr.bf16.mxu0 0
    %1516 = vmatpush1.bf16.msra.mxu0 0
    %1517 = vmatprep.subr.bf16.mxu0 0
    %1518 = vmatpush1.bf16.msra.mxu0 0
    %1519 = vmatprep.subr.bf16.mxu0 0
    %1520 = vmatpush1.bf16.msra.mxu0 0
    %1521 = vmatprep.subr.bf16.mxu0 0
    %1522 = vmatpush1.bf16.msra.mxu0 0
    %1523 = vmatprep.subr.bf16.mxu0 0
    %1524 = vmatpush1.bf16.msra.mxu0 %v1507
    %1525 = vmatprep.subr.bf16.mxu0 0
    %1526 = vmatpush2.bf16.msra.mxu0 0
    %1527 = vmatprep.subr.bf16.mxu0 0
    %1528 = vmatpush2.bf16.msra.mxu0 0
    %1529 = vmatprep.subr.bf16.mxu0 0
    %1530 = vmatpush2.bf16.msra.mxu0 0
    %1531 = vmatprep.subr.bf16.mxu0 0
    %1532 = vmatpush2.bf16.msra.mxu0 0
    %1533 = vmatprep.subr.bf16.mxu0 0
    %1534 = vmatpush2.bf16.msra.mxu0 0
    %1535 = vmatprep.subr.bf16.mxu0 0
    %1536 = vmatpush2.bf16.msra.mxu0 0
    %1537 = vmatprep.subr.bf16.mxu0 0
    %1538 = vmatpush2.bf16.msra.mxu0 0
    %1539 = vmatprep.subr.bf16.mxu0 0
    %1540 = vmatpush2.bf16.msra.mxu0 0
    %1541 = vmatprep.mubr.bf16.mxu0 0
    %1542 = vmatmul.mubr.bf16.gmra.mxu0 %v1501
    %v1543 = vpop.f32.mrf.mxu0
    %v1544 = vadd.f32 0.0, %v1543
    %v1545 = vpop.f32.mrf.mxu0
    %v1546 = vpop.f32.mrf.mxu0
    %v1547 = vadd.f32 0.0, %v1546
    %v1548 = vpop.f32.mrf.mxu0
    %1549 = vmatprep.mubr.bf16.mxu0 0
    %1550 = vmatmul.mubr.bf16.gmra.mxu0 %v1504
    %v1551 = vpop.f32.mrf.mxu0
    %v1552 = vadd.f32 0.0, %v1551
    %v1553 = vpop.f32.mrf.mxu0
    %v1554 = vpop.f32.mrf.mxu0
    %v1555 = vadd.f32 0.0, %v1554
    %v1556 = vpop.f32.mrf.mxu0
    %1557 = vdwg.mxu0
    %v1558 = vadd.f32 %v1050, %v1544
    %v1559 = vadd.f32 %v1053, %v1547
    %v1560 = vadd.f32 %v1058, %v1552
    %v1561 = vadd.f32 %v1061, %v1555
    %s1562 = scalar_lea.vmem %s2, 48
    %v1563 = vld [vmem:[%s1562] sm:$0xf]
    %v1564 = vld [vmem:[%s1562 + $0x4] sm:$0xf]
    %v1565 = vld [vmem:[%s1562 + $0x8] sm:$0xf]
    %v1566 = vld [vmem:[%s1562 + $0xc] sm:$0xf]
    %v1571 = vunpack.c.l.b16 %v1563
    %v1572 = vunpack.c.l.b16 %v1564
    %v1573 = vunpack.c.l.b16 %v1565
    %v1574 = vunpack.c.l.b16 %v1566
    %v1575 = vpack.c.b16 %v1572, %v1571
    %v1576 = vpack.c.b16 %v1574, %v1573
    %1579 = vmatprep.subr.bf16.mxu0 0
    %1580 = vmatpush1.bf16.msra.mxu0 0
    %1581 = vmatprep.subr.bf16.mxu0 0
    %1582 = vmatpush1.bf16.msra.mxu0 0
    %1583 = vmatprep.subr.bf16.mxu0 0
    %1584 = vmatpush1.bf16.msra.mxu0 0
    %1585 = vmatprep.subr.bf16.mxu0 0
    %1586 = vmatpush1.bf16.msra.mxu0 0
    %1587 = vmatprep.subr.bf16.mxu0 0
    %1588 = vmatpush1.bf16.msra.mxu0 0
    %1589 = vmatprep.subr.bf16.mxu0 0
    %1590 = vmatpush1.bf16.msra.mxu0 0
    %1591 = vmatprep.subr.bf16.mxu0 0
    %1592 = vmatpush1.bf16.msra.mxu0 %v1576
    %1593 = vmatprep.subr.bf16.mxu0 0
    %1594 = vmatpush1.bf16.msra.mxu0 %v1575
    %1595 = vmatprep.subr.bf16.mxu0 0
    %1596 = vmatpush2.bf16.msra.mxu0 0
    %1597 = vmatprep.subr.bf16.mxu0 0
    %1598 = vmatpush2.bf16.msra.mxu0 0
    %1599 = vmatprep.subr.bf16.mxu0 0
    %1600 = vmatpush2.bf16.msra.mxu0 0
    %1601 = vmatprep.subr.bf16.mxu0 0
    %1602 = vmatpush2.bf16.msra.mxu0 0
    %1603 = vmatprep.subr.bf16.mxu0 0
    %1604 = vmatpush2.bf16.msra.mxu0 0
    %1605 = vmatprep.subr.bf16.mxu0 0
    %1606 = vmatpush2.bf16.msra.mxu0 0
    %1607 = vmatprep.subr.bf16.mxu0 0
    %1608 = vmatpush2.bf16.msra.mxu0 0
    %1609 = vmatprep.subr.bf16.mxu0 0
    %1610 = vmatpush2.bf16.msra.mxu0 0
    %1611 = vmatprep.mubr.bf16.mxu0 0
    %1612 = vmatmul.mubr.bf16.gmra.mxu0 %v86
    %v1613 = vpop.f32.mrf.mxu0
    %v1614 = vadd.f32 0.0, %v1613
    %v1615 = vpop.f32.mrf.mxu0
    %v1616 = vpop.f32.mrf.mxu0
    %v1617 = vadd.f32 0.0, %v1616
    %v1618 = vpop.f32.mrf.mxu0
    %1619 = vmatprep.mubr.bf16.mxu0 0
    %1620 = vmatmul.mubr.bf16.gmra.mxu0 %v89
    %v1621 = vpop.f32.mrf.mxu0
    %v1622 = vadd.f32 0.0, %v1621
    %v1623 = vpop.f32.mrf.mxu0
    %v1624 = vpop.f32.mrf.mxu0
    %v1625 = vadd.f32 0.0, %v1624
    %v1626 = vpop.f32.mrf.mxu0
    %1627 = vdwg.mxu0
    %s1628 = scalar_lea.vmem %s2, 112
    %v1629 = vld [vmem:[%s1628] sm:$0xf]
    %v1630 = vld [vmem:[%s1628 + $0x4] sm:$0xf]
    %v1631 = vld [vmem:[%s1628 + $0x8] sm:$0xf]
    %v1632 = vld [vmem:[%s1628 + $0xc] sm:$0xf]
    %v1637 = vunpack.c.l.b16 %v1629
    %v1638 = vunpack.c.l.b16 %v1630
    %v1639 = vunpack.c.l.b16 %v1631
    %v1640 = vunpack.c.l.b16 %v1632
    %v1641 = vpack.c.b16 %v1638, %v1637
    %v1642 = vpack.c.b16 %v1640, %v1639
    %1645 = vmatprep.subr.bf16.mxu0 0
    %1646 = vmatpush1.bf16.msra.mxu0 0
    %1647 = vmatprep.subr.bf16.mxu0 0
    %1648 = vmatpush1.bf16.msra.mxu0 0
    %1649 = vmatprep.subr.bf16.mxu0 0
    %1650 = vmatpush1.bf16.msra.mxu0 0
    %1651 = vmatprep.subr.bf16.mxu0 0
    %1652 = vmatpush1.bf16.msra.mxu0 0
    %1653 = vmatprep.subr.bf16.mxu0 0
    %1654 = vmatpush1.bf16.msra.mxu0 0
    %1655 = vmatprep.subr.bf16.mxu0 0
    %1656 = vmatpush1.bf16.msra.mxu0 0
    %1657 = vmatprep.subr.bf16.mxu0 0
    %1658 = vmatpush1.bf16.msra.mxu0 %v1642
    %1659 = vmatprep.subr.bf16.mxu0 0
    %1660 = vmatpush1.bf16.msra.mxu0 %v1641
    %1661 = vmatprep.subr.bf16.mxu0 0
    %1662 = vmatpush2.bf16.msra.mxu0 0
    %1663 = vmatprep.subr.bf16.mxu0 0
    %1664 = vmatpush2.bf16.msra.mxu0 0
    %1665 = vmatprep.subr.bf16.mxu0 0
    %1666 = vmatpush2.bf16.msra.mxu0 0
    %1667 = vmatprep.subr.bf16.mxu0 0
    %1668 = vmatpush2.bf16.msra.mxu0 0
    %1669 = vmatprep.subr.bf16.mxu0 0
    %1670 = vmatpush2.bf16.msra.mxu0 0
    %1671 = vmatprep.subr.bf16.mxu0 0
    %1672 = vmatpush2.bf16.msra.mxu0 0
    %1673 = vmatprep.subr.bf16.mxu0 0
    %1674 = vmatpush2.bf16.msra.mxu0 0
    %1675 = vmatprep.subr.bf16.mxu0 0
    %1676 = vmatpush2.bf16.msra.mxu0 0
    %1677 = vmatprep.mubr.bf16.mxu0 0
    %1678 = vmatmul.mubr.bf16.gmra.mxu0 %v86
    %v1679 = vpop.f32.mrf.mxu0
    %v1680 = vadd.f32 0.0, %v1679
    %v1681 = vpop.f32.mrf.mxu0
    %v1682 = vpop.f32.mrf.mxu0
    %v1683 = vadd.f32 0.0, %v1682
    %v1684 = vpop.f32.mrf.mxu0
    %1685 = vmatprep.mubr.bf16.mxu0 0
    %1686 = vmatmul.mubr.bf16.gmra.mxu0 %v89
    %v1687 = vpop.f32.mrf.mxu0
    %v1688 = vadd.f32 0.0, %v1687
    %v1689 = vpop.f32.mrf.mxu0
    %v1690 = vpop.f32.mrf.mxu0
    %v1691 = vadd.f32 0.0, %v1690
    %v1692 = vpop.f32.mrf.mxu0
    %1693 = vdwg.mxu0
    %s1694 = scalar_lea.vmem %s2, 176
    %v1695 = vld [vmem:[%s1694] sm:$0xf]
    %v1696 = vld [vmem:[%s1694 + $0x4] sm:$0xf]
    %v1697 = vld [vmem:[%s1694 + $0x8] sm:$0xf]
    %v1698 = vld [vmem:[%s1694 + $0xc] sm:$0xf]
    %v1703 = vunpack.c.l.b16 %v1695
    %v1704 = vunpack.c.l.b16 %v1696
    %v1705 = vunpack.c.l.b16 %v1697
    %v1706 = vunpack.c.l.b16 %v1698
    %v1707 = vpack.c.b16 %v1704, %v1703
    %v1708 = vpack.c.b16 %v1706, %v1705
    %1711 = vmatprep.subr.bf16.mxu0 0
    %1712 = vmatpush1.bf16.msra.mxu0 0
    %1713 = vmatprep.subr.bf16.mxu0 0
    %1714 = vmatpush1.bf16.msra.mxu0 0
    %1715 = vmatprep.subr.bf16.mxu0 0
    %1716 = vmatpush1.bf16.msra.mxu0 0
    %1717 = vmatprep.subr.bf16.mxu0 0
    %1718 = vmatpush1.bf16.msra.mxu0 0
    %1719 = vmatprep.subr.bf16.mxu0 0
    %1720 = vmatpush1.bf16.msra.mxu0 0
    %1721 = vmatprep.subr.bf16.mxu0 0
    %1722 = vmatpush1.bf16.msra.mxu0 0
    %1723 = vmatprep.subr.bf16.mxu0 0
    %1724 = vmatpush1.bf16.msra.mxu0 %v1708
    %1725 = vmatprep.subr.bf16.mxu0 0
    %1726 = vmatpush1.bf16.msra.mxu0 %v1707
    %1727 = vmatprep.subr.bf16.mxu0 0
    %1728 = vmatpush2.bf16.msra.mxu0 0
    %1729 = vmatprep.subr.bf16.mxu0 0
    %1730 = vmatpush2.bf16.msra.mxu0 0
    %1731 = vmatprep.subr.bf16.mxu0 0
    %1732 = vmatpush2.bf16.msra.mxu0 0
    %1733 = vmatprep.subr.bf16.mxu0 0
    %1734 = vmatpush2.bf16.msra.mxu0 0
    %1735 = vmatprep.subr.bf16.mxu0 0
    %1736 = vmatpush2.bf16.msra.mxu0 0
    %1737 = vmatprep.subr.bf16.mxu0 0
    %1738 = vmatpush2.bf16.msra.mxu0 0
    %1739 = vmatprep.subr.bf16.mxu0 0
    %1740 = vmatpush2.bf16.msra.mxu0 0
    %1741 = vmatprep.subr.bf16.mxu0 0
    %1742 = vmatpush2.bf16.msra.mxu0 0
    %1743 = vmatprep.mubr.bf16.mxu0 0
    %1744 = vmatmul.mubr.bf16.gmra.mxu0 %v86
    %v1745 = vpop.f32.mrf.mxu0
    %v1746 = vadd.f32 0.0, %v1745
    %v1747 = vpop.f32.mrf.mxu0
    %v1748 = vpop.f32.mrf.mxu0
    %v1749 = vadd.f32 0.0, %v1748
    %v1750 = vpop.f32.mrf.mxu0
    %1751 = vmatprep.mubr.bf16.mxu0 0
    %1752 = vmatmul.mubr.bf16.gmra.mxu0 %v89
    %v1753 = vpop.f32.mrf.mxu0
    %v1754 = vadd.f32 0.0, %v1753
    %v1755 = vpop.f32.mrf.mxu0
    %v1756 = vpop.f32.mrf.mxu0
    %v1757 = vadd.f32 0.0, %v1756
    %v1758 = vpop.f32.mrf.mxu0
    %1759 = vdwg.mxu0
    %v1760 = vpack.c.bf16 %v1617, %v1614
    %v1761 = vpack.c.bf16 %v1625, %v1622
    %v1762 = vpack.c.bf16 %v1683, %v1680
    %v1763 = vpack.c.bf16 %v1691, %v1688
    %v1764 = vpack.c.bf16 %v1749, %v1746
    %v1765 = vpack.c.bf16 %v1757, %v1754
    %v1767 = vsel %vm278, %v1760, 0
    %v1770 = vsel %vm278, %v1762, 0
    %1772 = vmatprep.subr.bf16.mxu0 0
    %1773 = vmatpush1.bf16.xpose.msra.mxu0 0
    %1774 = vmatprep.subr.bf16.mxu0 0
    %1775 = vmatpush1.bf16.xpose.msra.mxu0 0
    %1776 = vmatprep.subr.bf16.mxu0 0
    %1777 = vmatpush1.bf16.xpose.msra.mxu0 0
    %1778 = vmatprep.subr.bf16.mxu0 0
    %1779 = vmatpush1.bf16.xpose.msra.mxu0 0
    %1780 = vmatprep.subr.bf16.mxu0 0
    %1781 = vmatpush1.bf16.xpose.msra.mxu0 0
    %1782 = vmatprep.subr.bf16.mxu0 0
    %1783 = vmatpush1.bf16.xpose.msra.mxu0 0
    %1784 = vmatprep.subr.bf16.mxu0 0
    %1785 = vmatpush1.bf16.xpose.msra.mxu0 0
    %1786 = vmatprep.subr.bf16.mxu0 0
    %1787 = vmatpush1.bf16.xpose.msra.mxu0 %v1770
    %1788 = vmatprep.subr.bf16.mxu0 0
    %1789 = vmatpush2.bf16.xpose.msra.mxu0 0
    %1790 = vmatprep.subr.bf16.mxu0 0
    %1791 = vmatpush2.bf16.xpose.msra.mxu0 0
    %1792 = vmatprep.subr.bf16.mxu0 0
    %1793 = vmatpush2.bf16.xpose.msra.mxu0 0
    %1794 = vmatprep.subr.bf16.mxu0 0
    %1795 = vmatpush2.bf16.xpose.msra.mxu0 0
    %1796 = vmatprep.subr.bf16.mxu0 0
    %1797 = vmatpush2.bf16.xpose.msra.mxu0 0
    %1798 = vmatprep.subr.bf16.mxu0 0
    %1799 = vmatpush2.bf16.xpose.msra.mxu0 0
    %1800 = vmatprep.subr.bf16.mxu0 0
    %1801 = vmatpush2.bf16.xpose.msra.mxu0 0
    %1802 = vmatprep.subr.bf16.mxu0 0
    %1803 = vmatpush2.bf16.xpose.msra.mxu0 0
    %1804 = vmatprep.mubr.bf16.mxu0 0
    %1805 = vmatmul.mubr.bf16.gmra.mxu0 %v1767
    %v1806 = vpop.f32.mrf.mxu0
    %v1807 = vadd.f32 0.0, %v1806
    %v1808 = vpop.f32.mrf.mxu0
    %v1809 = vpop.f32.mrf.mxu0
    %v1810 = vadd.f32 0.0, %v1809
    %v1811 = vpop.f32.mrf.mxu0
    %1812 = vdwg.mxu0
    %v1814 = vsel %vm278, %v1761, 0
    %v1817 = vsel %vm278, %v1763, 0
    %1819 = vmatprep.subr.bf16.mxu0 0
    %1820 = vmatpush1.bf16.xpose.msra.mxu0 0
    %1821 = vmatprep.subr.bf16.mxu0 0
    %1822 = vmatpush1.bf16.xpose.msra.mxu0 0
    %1823 = vmatprep.subr.bf16.mxu0 0
    %1824 = vmatpush1.bf16.xpose.msra.mxu0 0
    %1825 = vmatprep.subr.bf16.mxu0 0
    %1826 = vmatpush1.bf16.xpose.msra.mxu0 0
    %1827 = vmatprep.subr.bf16.mxu0 0
    %1828 = vmatpush1.bf16.xpose.msra.mxu0 0
    %1829 = vmatprep.subr.bf16.mxu0 0
    %1830 = vmatpush1.bf16.xpose.msra.mxu0 0
    %1831 = vmatprep.subr.bf16.mxu0 0
    %1832 = vmatpush1.bf16.xpose.msra.mxu0 0
    %1833 = vmatprep.subr.bf16.mxu0 0
    %1834 = vmatpush1.bf16.xpose.msra.mxu0 %v1817
    %1835 = vmatprep.subr.bf16.mxu0 0
    %1836 = vmatpush2.bf16.xpose.msra.mxu0 0
    %1837 = vmatprep.subr.bf16.mxu0 0
    %1838 = vmatpush2.bf16.xpose.msra.mxu0 0
    %1839 = vmatprep.subr.bf16.mxu0 0
    %1840 = vmatpush2.bf16.xpose.msra.mxu0 0
    %1841 = vmatprep.subr.bf16.mxu0 0
    %1842 = vmatpush2.bf16.xpose.msra.mxu0 0
    %1843 = vmatprep.subr.bf16.mxu0 0
    %1844 = vmatpush2.bf16.xpose.msra.mxu0 0
    %1845 = vmatprep.subr.bf16.mxu0 0
    %1846 = vmatpush2.bf16.xpose.msra.mxu0 0
    %1847 = vmatprep.subr.bf16.mxu0 0
    %1848 = vmatpush2.bf16.xpose.msra.mxu0 0
    %1849 = vmatprep.subr.bf16.mxu0 0
    %1850 = vmatpush2.bf16.xpose.msra.mxu0 0
    %1851 = vmatprep.mubr.bf16.mxu0 0
    %1852 = vmatmul.mubr.bf16.gmra.mxu0 %v1814
    %v1853 = vpop.f32.mrf.mxu0
    %v1854 = vadd.f32 0.0, %v1853
    %v1855 = vpop.f32.mrf.mxu0
    %v1856 = vpop.f32.mrf.mxu0
    %v1857 = vadd.f32 0.0, %v1856
    %v1858 = vpop.f32.mrf.mxu0
    %1859 = vdwg.mxu0
    %v1860 = vsel %vm373, %v1807, -inf
    %1861 = vmax.xlane.f32.xlu0 %v1860
    %v1862 = vpop.xlane.xlu0 %1861
    %v1863 = vsel %vm373, %v1810, -inf
    %1864 = vmax.xlane.f32.xlu0 %v1863
    %v1865 = vpop.xlane.xlu0 %1864
    %v1866 = vsel %vm373, %v1854, -inf
    %1867 = vmax.xlane.f32.xlu0 %v1866
    %v1868 = vpop.xlane.xlu0 %1867
    %v1869 = vsel %vm373, %v1857, -inf
    %1870 = vmax.xlane.f32.xlu0 %v1869
    %v1871 = vpop.xlane.xlu0 %1870
    %v1872 = vsub.f32 %v1807, %v1862
    %v1873 = vsub.f32 %v1810, %v1865
    %v1874 = vsub.f32 %v1854, %v1868
    %v1875 = vsub.f32 %v1857, %v1871
    %v1876 = vmul.f32 %v1872, 1.442695
    %v1877 = vpow.pop %v1876
    %v1878 = vmul.f32 %v1873, 1.442695
    %v1879 = vpow.pop %v1878
    %v1880 = vmul.f32 %v1874, 1.442695
    %v1881 = vpow.pop %v1880
    %v1882 = vmul.f32 %v1875, 1.442695
    %v1883 = vpow.pop %v1882
    %v1884 = vsel %vm373, %v1877, 0.0
    %1885 = vadd.xlane.f32.xlu0 %v1884
    %v1886 = vpop.xlane.xlu0 %1885
    %v1887 = vsel %vm373, %v1879, 0.0
    %1888 = vadd.xlane.f32.xlu0 %v1887
    %v1889 = vpop.xlane.xlu0 %1888
    %v1890 = vsel %vm373, %v1881, 0.0
    %1891 = vadd.xlane.f32.xlu0 %v1890
    %v1892 = vpop.xlane.xlu0 %1891
    %v1893 = vsel %vm373, %v1883, 0.0
    %1894 = vadd.xlane.f32.xlu0 %v1893
    %v1895 = vpop.xlane.xlu0 %1894
    %v1896 = vrcp.pop %v1886
    %v1897 = vrcp.pop %v1889
    %v1898 = vrcp.pop %v1892
    %v1899 = vrcp.pop %v1895
    %v1900 = vmul.f32 %v1877, %v1896
    %v1901 = vmul.f32 %v1879, %v1897
    %v1902 = vmul.f32 %v1881, %v1898
    %v1903 = vmul.f32 %v1883, %v1899
    %v1904 = vpack.c.bf16 %v1901, %v1900
    %v1905 = vpack.c.bf16 %v1903, %v1902
    %v1907 = vsel %vm373, %v1904, 0
    %1909 = vmatprep.subr.bf16.mxu0 0
    %1910 = vmatpush1.bf16.msra.mxu0 0
    %1911 = vmatprep.subr.bf16.mxu0 0
    %1912 = vmatpush1.bf16.msra.mxu0 0
    %1913 = vmatprep.subr.bf16.mxu0 0
    %1914 = vmatpush1.bf16.msra.mxu0 0
    %1915 = vmatprep.subr.bf16.mxu0 0
    %1916 = vmatpush1.bf16.msra.mxu0 0
    %1917 = vmatprep.subr.bf16.mxu0 0
    %1918 = vmatpush1.bf16.msra.mxu0 0
    %1919 = vmatprep.subr.bf16.mxu0 0
    %1920 = vmatpush1.bf16.msra.mxu0 0
    %1921 = vmatprep.subr.bf16.mxu0 0
    %1922 = vmatpush1.bf16.msra.mxu0 0
    %1923 = vmatprep.subr.bf16.mxu0 0
    %1924 = vmatpush1.bf16.msra.mxu0 %v1764
    %1925 = vmatprep.subr.bf16.mxu0 0
    %1926 = vmatpush2.bf16.msra.mxu0 0
    %1927 = vmatprep.subr.bf16.mxu0 0
    %1928 = vmatpush2.bf16.msra.mxu0 0
    %1929 = vmatprep.subr.bf16.mxu0 0
    %1930 = vmatpush2.bf16.msra.mxu0 0
    %1931 = vmatprep.subr.bf16.mxu0 0
    %1932 = vmatpush2.bf16.msra.mxu0 0
    %1933 = vmatprep.subr.bf16.mxu0 0
    %1934 = vmatpush2.bf16.msra.mxu0 0
    %1935 = vmatprep.subr.bf16.mxu0 0
    %1936 = vmatpush2.bf16.msra.mxu0 0
    %1937 = vmatprep.subr.bf16.mxu0 0
    %1938 = vmatpush2.bf16.msra.mxu0 0
    %1939 = vmatprep.subr.bf16.mxu0 0
    %1940 = vmatpush2.bf16.msra.mxu0 0
    %1941 = vmatprep.mubr.bf16.mxu0 0
    %1942 = vmatmul.mubr.bf16.gmra.mxu0 %v1907
    %v1943 = vpop.f32.mrf.mxu0
    %v1944 = vadd.f32 0.0, %v1943
    %v1945 = vpop.f32.mrf.mxu0
    %v1946 = vpop.f32.mrf.mxu0
    %v1947 = vadd.f32 0.0, %v1946
    %v1948 = vpop.f32.mrf.mxu0
    %1949 = vdwg.mxu0
    %v1951 = vsel %vm373, %v1905, 0
    %1953 = vmatprep.subr.bf16.mxu0 0
    %1954 = vmatpush1.bf16.msra.mxu0 0
    %1955 = vmatprep.subr.bf16.mxu0 0
    %1956 = vmatpush1.bf16.msra.mxu0 0
    %1957 = vmatprep.subr.bf16.mxu0 0
    %1958 = vmatpush1.bf16.msra.mxu0 0
    %1959 = vmatprep.subr.bf16.mxu0 0
    %1960 = vmatpush1.bf16.msra.mxu0 0
    %1961 = vmatprep.subr.bf16.mxu0 0
    %1962 = vmatpush1.bf16.msra.mxu0 0
    %1963 = vmatprep.subr.bf16.mxu0 0
    %1964 = vmatpush1.bf16.msra.mxu0 0
    %1965 = vmatprep.subr.bf16.mxu0 0
    %1966 = vmatpush1.bf16.msra.mxu0 0
    %1967 = vmatprep.subr.bf16.mxu0 0
    %1968 = vmatpush1.bf16.msra.mxu0 %v1765
    %1969 = vmatprep.subr.bf16.mxu0 0
    %1970 = vmatpush2.bf16.msra.mxu0 0
    %1971 = vmatprep.subr.bf16.mxu0 0
    %1972 = vmatpush2.bf16.msra.mxu0 0
    %1973 = vmatprep.subr.bf16.mxu0 0
    %1974 = vmatpush2.bf16.msra.mxu0 0
    %1975 = vmatprep.subr.bf16.mxu0 0
    %1976 = vmatpush2.bf16.msra.mxu0 0
    %1977 = vmatprep.subr.bf16.mxu0 0
    %1978 = vmatpush2.bf16.msra.mxu0 0
    %1979 = vmatprep.subr.bf16.mxu0 0
    %1980 = vmatpush2.bf16.msra.mxu0 0
    %1981 = vmatprep.subr.bf16.mxu0 0
    %1982 = vmatpush2.bf16.msra.mxu0 0
    %1983 = vmatprep.subr.bf16.mxu0 0
    %1984 = vmatpush2.bf16.msra.mxu0 0
    %1985 = vmatprep.mubr.bf16.mxu0 0
    %1986 = vmatmul.mubr.bf16.gmra.mxu0 %v1951
    %v1987 = vpop.f32.mrf.mxu0
    %v1988 = vadd.f32 0.0, %v1987
    %v1989 = vpop.f32.mrf.mxu0
    %v1990 = vpop.f32.mrf.mxu0
    %v1991 = vadd.f32 0.0, %v1990
    %v1992 = vpop.f32.mrf.mxu0
    %1993 = vdwg.mxu0
    %v1994 = vpack.c.bf16 %v1947, %v1944
    %v1995 = vpack.c.bf16 %v1991, %v1988
    %s1996 = scalar_lea.vmem %s3, 12
    %v1997 = vld [vmem:[%s1996] sm:$0xf]
    %v1999 = vsel %vm278, %v1994, 0
    %v2002 = vsel %vm278, %v1995, 0
    %v2005 = vsel %vm953, %v1997, 0
    %2007 = vmatprep.subr.bf16.mxu0 0
    %2008 = vmatpush1.bf16.msra.mxu0 0
    %2009 = vmatprep.subr.bf16.mxu0 0
    %2010 = vmatpush1.bf16.msra.mxu0 0
    %2011 = vmatprep.subr.bf16.mxu0 0
    %2012 = vmatpush1.bf16.msra.mxu0 0
    %2013 = vmatprep.subr.bf16.mxu0 0
    %2014 = vmatpush1.bf16.msra.mxu0 0
    %2015 = vmatprep.subr.bf16.mxu0 0
    %2016 = vmatpush1.bf16.msra.mxu0 0
    %2017 = vmatprep.subr.bf16.mxu0 0
    %2018 = vmatpush1.bf16.msra.mxu0 0
    %2019 = vmatprep.subr.bf16.mxu0 0
    %2020 = vmatpush1.bf16.msra.mxu0 0
    %2021 = vmatprep.subr.bf16.mxu0 0
    %2022 = vmatpush1.bf16.msra.mxu0 %v2005
    %2023 = vmatprep.subr.bf16.mxu0 0
    %2024 = vmatpush2.bf16.msra.mxu0 0
    %2025 = vmatprep.subr.bf16.mxu0 0
    %2026 = vmatpush2.bf16.msra.mxu0 0
    %2027 = vmatprep.subr.bf16.mxu0 0
    %2028 = vmatpush2.bf16.msra.mxu0 0
    %2029 = vmatprep.subr.bf16.mxu0 0
    %2030 = vmatpush2.bf16.msra.mxu0 0
    %2031 = vmatprep.subr.bf16.mxu0 0
    %2032 = vmatpush2.bf16.msra.mxu0 0
    %2033 = vmatprep.subr.bf16.mxu0 0
    %2034 = vmatpush2.bf16.msra.mxu0 0
    %2035 = vmatprep.subr.bf16.mxu0 0
    %2036 = vmatpush2.bf16.msra.mxu0 0
    %2037 = vmatprep.subr.bf16.mxu0 0
    %2038 = vmatpush2.bf16.msra.mxu0 0
    %2039 = vmatprep.mubr.bf16.mxu0 0
    %2040 = vmatmul.mubr.bf16.gmra.mxu0 %v1999
    %v2041 = vpop.f32.mrf.mxu0
    %v2042 = vadd.f32 0.0, %v2041
    %v2043 = vpop.f32.mrf.mxu0
    %v2044 = vpop.f32.mrf.mxu0
    %v2045 = vadd.f32 0.0, %v2044
    %v2046 = vpop.f32.mrf.mxu0
    %2047 = vmatprep.mubr.bf16.mxu0 0
    %2048 = vmatmul.mubr.bf16.gmra.mxu0 %v2002
    %v2049 = vpop.f32.mrf.mxu0
    %v2050 = vadd.f32 0.0, %v2049
    %v2051 = vpop.f32.mrf.mxu0
    %v2052 = vpop.f32.mrf.mxu0
    %v2053 = vadd.f32 0.0, %v2052
    %v2054 = vpop.f32.mrf.mxu0
    %2055 = vdwg.mxu0
    %v2056 = vadd.f32 %v1558, %v2042
    %v2057 = vadd.f32 %v1559, %v2045
    %v2058 = vadd.f32 %v1560, %v2050
    %v2059 = vadd.f32 %v1561, %v2053
    %v2060 = vlaneseq
    %v2061 = vshrl.u32 %v2060, 7
    %v2062 = vsub.s32 1, %v2061
    %v2063 = vrot.slane %v29, %v2062
    %v2064 = vadd.f32 %v2056, %v2063
    %v2065 = vadd.f32 %v2057, %v2063
    %v2066 = vadd.f32 %v2058, %v2063
    %v2067 = vadd.f32 %v2059, %v2063
    %v2068 = vadd.f32 %v2064, %v25
    %v2069 = vadd.f32 %v2065, %v26
    %v2070 = vadd.f32 %v2066, %v27
    %v2071 = vadd.f32 %v2067, %v28
    %v2072 = vmul.f32 %v2068, %v2068
    %v2073 = vmul.f32 %v2069, %v2069
    %v2074 = vmul.f32 %v2070, %v2070
    %v2075 = vmul.f32 %v2071, %v2071
    %v2076 = vsel %vm34, %v2072, 0.0
    %2077 = vadd.xlane.f32.xlu0 %v2076
    %v2078 = vpop.xlane.xlu0 %2077
    %v2079 = vsel %vm34, %v2073, 0.0
    %2080 = vadd.xlane.f32.xlu0 %v2079
    %v2081 = vpop.xlane.xlu0 %2080
    %v2082 = vsel %vm34, %v2074, 0.0
    %2083 = vadd.xlane.f32.xlu0 %v2082
    %v2084 = vpop.xlane.xlu0 %2083
    %v2085 = vsel %vm34, %v2075, 0.0
    %2086 = vadd.xlane.f32.xlu0 %v2085
    %v2087 = vpop.xlane.xlu0 %2086
    %v2088 = vmax.f32 %v2078, 1e-24
    %v2089 = vmax.f32 %v2081, 1e-24
    %v2090 = vmax.f32 %v2084, 1e-24
    %v2091 = vmax.f32 %v2087, 1e-24
    %v2092 = vrsqrt.pop %v2088
    %v2093 = vrsqrt.pop %v2089
    %v2094 = vrsqrt.pop %v2090
    %v2095 = vrsqrt.pop %v2091
    %v2096 = vmul.f32 %v2068, %v2092
    %v2097 = vmul.f32 %v2069, %v2093
    %v2098 = vmul.f32 %v2070, %v2094
    %v2099 = vmul.f32 %v2071, %v2095
    %v2100 = vlaneseq
    %v2101 = vshrl.u32 %v2100, 7
    %v2102 = vsub.s32 2, %v2101
    %v2103 = vrot.slane %v29, %v2102
    %v2104 = vmul.f32 %v2096, %v2103
    %v2105 = vmul.f32 %v2097, %v2103
    %v2106 = vmul.f32 %v2098, %v2103
    %v2107 = vmul.f32 %v2099, %v2103
    %v2108 = vpack.c.bf16 %v2105, %v2104
    %v2109 = vpack.c.bf16 %v2107, %v2106
    %v2110 = vld [vmem:[%s4] sm:$0xf]
    %v2111 = vld [vmem:[%s4 + $0x4] sm:$0xf]
    %v2112 = vld [vmem:[%s4 + $0x8] sm:$0xf]
    %v2113 = vld [vmem:[%s4 + $0xc] sm:$0xf]
    %v2114 = vlaneseq
    %v2115 = vshrl.u32 %v2114, 7
    %v2116 = vsub.s32 3, %v2115
    %v2117 = vrot.slane %v29, %v2116
    %v2122 = vunpack.c.l.b16 %v2110
    %v2123 = vunpack.c.l.b16 %v2111
    %v2124 = vunpack.c.l.b16 %v2112
    %v2125 = vunpack.c.l.b16 %v2113
    %v2126 = vpack.c.b16 %v2123, %v2122
    %v2127 = vpack.c.b16 %v2125, %v2124
    %v2131 = vsel %vm34, %v2108, 0
    %v2134 = vsel %vm34, %v2109, 0
    %2136 = vmatprep.subr.bf16.mxu0 0
    %2137 = vmatpush1.bf16.msra.mxu0 0
    %2138 = vmatprep.subr.bf16.mxu0 0
    %2139 = vmatpush1.bf16.msra.mxu0 0
    %2140 = vmatprep.subr.bf16.mxu0 0
    %2141 = vmatpush1.bf16.msra.mxu0 0
    %2142 = vmatprep.subr.bf16.mxu0 0
    %2143 = vmatpush1.bf16.msra.mxu0 0
    %2144 = vmatprep.subr.bf16.mxu0 0
    %2145 = vmatpush1.bf16.msra.mxu0 0
    %2146 = vmatprep.subr.bf16.mxu0 0
    %2147 = vmatpush1.bf16.msra.mxu0 0
    %2148 = vmatprep.subr.bf16.mxu0 0
    %2149 = vmatpush1.bf16.msra.mxu0 %v2127
    %2150 = vmatprep.subr.bf16.mxu0 0
    %2151 = vmatpush1.bf16.msra.mxu0 %v2126
    %2152 = vmatprep.subr.bf16.mxu0 0
    %2153 = vmatpush2.bf16.msra.mxu0 0
    %2154 = vmatprep.subr.bf16.mxu0 0
    %2155 = vmatpush2.bf16.msra.mxu0 0
    %2156 = vmatprep.subr.bf16.mxu0 0
    %2157 = vmatpush2.bf16.msra.mxu0 0
    %2158 = vmatprep.subr.bf16.mxu0 0
    %2159 = vmatpush2.bf16.msra.mxu0 0
    %2160 = vmatprep.subr.bf16.mxu0 0
    %2161 = vmatpush2.bf16.msra.mxu0 0
    %2162 = vmatprep.subr.bf16.mxu0 0
    %2163 = vmatpush2.bf16.msra.mxu0 0
    %2164 = vmatprep.subr.bf16.mxu0 0
    %2165 = vmatpush2.bf16.msra.mxu0 0
    %2166 = vmatprep.subr.bf16.mxu0 0
    %2167 = vmatpush2.bf16.msra.mxu0 0
    %2168 = vmatprep.mubr.bf16.mxu0 0
    %2169 = vmatmul.mubr.bf16.gmra.mxu0 %v2131
    %v2170 = vpop.f32.mrf.mxu0
    %v2171 = vadd.f32 %v2117, %v2170
    %v2172 = vpop.f32.mrf.mxu0
    %v2173 = vpop.f32.mrf.mxu0
    %v2174 = vadd.f32 %v2117, %v2173
    %v2175 = vpop.f32.mrf.mxu0
    %2176 = vmatprep.mubr.bf16.mxu0 0
    %2177 = vmatmul.mubr.bf16.gmra.mxu0 %v2134
    %v2178 = vpop.f32.mrf.mxu0
    %v2179 = vadd.f32 %v2117, %v2178
    %v2180 = vpop.f32.mrf.mxu0
    %v2181 = vpop.f32.mrf.mxu0
    %v2182 = vadd.f32 %v2117, %v2181
    %v2183 = vpop.f32.mrf.mxu0
    %2184 = vdwg.mxu0
    %v2185 = vxor.u32 %v2171, 2147483648
    %v2186 = vxor.u32 %v2174, 2147483648
    %v2187 = vxor.u32 %v2179, 2147483648
    %v2188 = vxor.u32 %v2182, 2147483648
    %v2189 = vmul.f32 %v2185, 1.442695
    %v2190 = vpow.pop %v2189
    %v2191 = vmul.f32 %v2186, 1.442695
    %v2192 = vpow.pop %v2191
    %v2193 = vmul.f32 %v2187, 1.442695
    %v2194 = vpow.pop %v2193
    %v2195 = vmul.f32 %v2188, 1.442695
    %v2196 = vpow.pop %v2195
    %v2197 = vadd.f32 %v2190, 1.0
    %v2198 = vadd.f32 %v2192, 1.0
    %v2199 = vadd.f32 %v2194, 1.0
    %v2200 = vadd.f32 %v2196, 1.0
    %v2201 = vrcp.pop %v2197
    %v2202 = vmul.f32 1.0, %v2201
    %v2203 = vrcp.pop %v2198
    %v2204 = vmul.f32 1.0, %v2203
    %v2205 = vrcp.pop %v2199
    %v2206 = vmul.f32 1.0, %v2205
    %v2207 = vrcp.pop %v2200
    %v2208 = vmul.f32 1.0, %v2207
    %v2209 = vmul.f32 %v2171, %v2202
    %v2210 = vmul.f32 %v2174, %v2204
    %v2211 = vmul.f32 %v2179, %v2206
    %v2212 = vmul.f32 %v2182, %v2208
    %v2213 = vpack.c.bf16 %v2210, %v2209
    %v2214 = vpack.c.bf16 %v2212, %v2211
    %v2215 = vld [vmem:[%s5] sm:$0xf]
    %v2216 = vld [vmem:[%s5 + $0x4] sm:$0xf]
    %v2217 = vld [vmem:[%s5 + $0x8] sm:$0xf]
    %v2218 = vld [vmem:[%s5 + $0xc] sm:$0xf]
    %v2219 = vlaneseq
    %v2220 = vshrl.u32 %v2219, 7
    %v2221 = vsub.s32 4, %v2220
    %v2222 = vrot.slane %v29, %v2221
    %v2227 = vunpack.c.l.b16 %v2215
    %v2228 = vunpack.c.l.b16 %v2216
    %v2229 = vunpack.c.l.b16 %v2217
    %v2230 = vunpack.c.l.b16 %v2218
    %v2231 = vpack.c.b16 %v2228, %v2227
    %v2232 = vpack.c.b16 %v2230, %v2229
    %v2236 = vsel %vm34, %v2213, 0
    %v2239 = vsel %vm34, %v2214, 0
    %2241 = vmatprep.subr.bf16.mxu0 0
    %2242 = vmatpush1.bf16.msra.mxu0 0
    %2243 = vmatprep.subr.bf16.mxu0 0
    %2244 = vmatpush1.bf16.msra.mxu0 0
    %2245 = vmatprep.subr.bf16.mxu0 0
    %2246 = vmatpush1.bf16.msra.mxu0 0
    %2247 = vmatprep.subr.bf16.mxu0 0
    %2248 = vmatpush1.bf16.msra.mxu0 0
    %2249 = vmatprep.subr.bf16.mxu0 0
    %2250 = vmatpush1.bf16.msra.mxu0 0
    %2251 = vmatprep.subr.bf16.mxu0 0
    %2252 = vmatpush1.bf16.msra.mxu0 0
    %2253 = vmatprep.subr.bf16.mxu0 0
    %2254 = vmatpush1.bf16.msra.mxu0 %v2232
    %2255 = vmatprep.subr.bf16.mxu0 0
    %2256 = vmatpush1.bf16.msra.mxu0 %v2231
    %2257 = vmatprep.subr.bf16.mxu0 0
    %2258 = vmatpush2.bf16.msra.mxu0 0
    %2259 = vmatprep.subr.bf16.mxu0 0
    %2260 = vmatpush2.bf16.msra.mxu0 0
    %2261 = vmatprep.subr.bf16.mxu0 0
    %2262 = vmatpush2.bf16.msra.mxu0 0
    %2263 = vmatprep.subr.bf16.mxu0 0
    %2264 = vmatpush2.bf16.msra.mxu0 0
    %2265 = vmatprep.subr.bf16.mxu0 0
    %2266 = vmatpush2.bf16.msra.mxu0 0
    %2267 = vmatprep.subr.bf16.mxu0 0
    %2268 = vmatpush2.bf16.msra.mxu0 0
    %2269 = vmatprep.subr.bf16.mxu0 0
    %2270 = vmatpush2.bf16.msra.mxu0 0
    %2271 = vmatprep.subr.bf16.mxu0 0
    %2272 = vmatpush2.bf16.msra.mxu0 0
    %2273 = vmatprep.mubr.bf16.mxu0 0
    %2274 = vmatmul.mubr.bf16.gmra.mxu0 %v2236
    %v2275 = vpop.f32.mrf.mxu0
    %v2276 = vadd.f32 %v2222, %v2275
    %v2277 = vpop.f32.mrf.mxu0
    %v2278 = vpop.f32.mrf.mxu0
    %v2279 = vadd.f32 %v2222, %v2278
    %v2280 = vpop.f32.mrf.mxu0
    %2281 = vmatprep.mubr.bf16.mxu0 0
    %2282 = vmatmul.mubr.bf16.gmra.mxu0 %v2239
    %v2283 = vpop.f32.mrf.mxu0
    %v2284 = vadd.f32 %v2222, %v2283
    %v2285 = vpop.f32.mrf.mxu0
    %v2286 = vpop.f32.mrf.mxu0
    %v2287 = vadd.f32 %v2222, %v2286
    %v2288 = vpop.f32.mrf.mxu0
    %2289 = vdwg.mxu0
    %v2290 = vadd.f32 %v2276, %v2104
    %v2291 = vadd.f32 %v2279, %v2105
    %v2292 = vadd.f32 %v2284, %v2106
    %v2293 = vadd.f32 %v2287, %v2107
    %v2294 = vmul.f32 %v2290, %v2290
    %v2295 = vmul.f32 %v2291, %v2291
    %v2296 = vmul.f32 %v2292, %v2292
    %v2297 = vmul.f32 %v2293, %v2293
    %v2298 = vsel %vm34, %v2294, 0.0
    %2299 = vadd.xlane.f32.xlu0 %v2298
    %v2300 = vpop.xlane.xlu0 %2299
    %v2301 = vsel %vm34, %v2295, 0.0
    %2302 = vadd.xlane.f32.xlu0 %v2301
    %v2303 = vpop.xlane.xlu0 %2302
    %v2304 = vsel %vm34, %v2296, 0.0
    %2305 = vadd.xlane.f32.xlu0 %v2304
    %v2306 = vpop.xlane.xlu0 %2305
    %v2307 = vsel %vm34, %v2297, 0.0
    %2308 = vadd.xlane.f32.xlu0 %v2307
    %v2309 = vpop.xlane.xlu0 %2308
    %v2310 = vmax.f32 %v2300, 1e-24
    %v2311 = vmax.f32 %v2303, 1e-24
    %v2312 = vmax.f32 %v2306, 1e-24
    %v2313 = vmax.f32 %v2309, 1e-24
    %v2314 = vrsqrt.pop %v2310
    %v2315 = vrsqrt.pop %v2311
    %v2316 = vrsqrt.pop %v2312
    %v2317 = vrsqrt.pop %v2313
    %v2318 = vmul.f32 %v2290, %v2314
    %v2319 = vmul.f32 %v2291, %v2315
    %v2320 = vmul.f32 %v2292, %v2316
    %v2321 = vmul.f32 %v2293, %v2317
    %v2322 = vlaneseq
    %v2323 = vshrl.u32 %v2322, 7
    %v2324 = vsub.s32 5, %v2323
    %v2325 = vrot.slane %v29, %v2324
    %v2326 = vmul.f32 %v2318, %v2325
    %v2327 = vmul.f32 %v2319, %v2325
    %v2328 = vmul.f32 %v2320, %v2325
    %v2329 = vmul.f32 %v2321, %v2325
    %2330 = vst.msk [vmem:[#allocation2] sm:$0xff] %vm34, %v2326
    %2331 = vst.msk [vmem:[#allocation2 + $0x8] sm:$0xff] %vm34, %v2327
    %2332 = vst.msk [vmem:[#allocation2 + $0x10] sm:$0xff] %vm34, %v2328
    %2333 = vst.msk [vmem:[#allocation2 + $0x18] sm:$0xff] %vm34, %v2329
    // Predicated region
    $region26: #{tpu_custom_call.1} parent=1 // pred_check
      _
    $region27: #{tpu_custom_call.1} parent=1 // pred_check_branch
      %2335 = sbr.rel (0) target = $region29
    $region28: #{tpu_custom_call.1} parent=1 // pred_region
      %s2337 = ssub.s32 512, 512
      %2338 = vsyncadd [#allocation3], %s2337
      %s2339 = sshll.u32 [#allocation2], 4
      %s2340 = int_to_ptr.vmem [resolvable:$true] %s2339
      %2345 = dma.vmem_to_hbm [thread:$0]  %s2340, 512, %s6, [#allocation3], 128, 128, 8
    $region29: #{tpu_custom_call.1} parent=1 // pred_fallthru
      _
    // Predicated region
    $region30: #{tpu_custom_call.1} parent=1 // pred_check
      _
    $region31: #{tpu_custom_call.1} parent=1 // pred_check_branch
      %2347 = sbr.rel (0) target = $region33
    $region32: #{tpu_custom_call.1} parent=1 // pred_region
      %2348 = dma.done [#allocation3], 512
    $region33: #{tpu_custom_call.1} parent=1 // pred_fallthru
      _
    %2349 = vsyncpa [#allocation3], 1

</llo_original>
